<compile_context>
chip_gen: v5e
topology: v5e:2x2
jax: 0.10.0
libtpu: 0.0.40
codegen_flags: <defaults>
</compile_context>

<pallas_src>
import jax
import jax.numpy as jnp
import numpy as np
from jax import lax
from jax.experimental import pallas as pl
from jax.experimental.pallas import tpu as pltpu

_SUBLANE = 8


# ----------------------------------------------------------------------------
# Fused kernel: embedding + all LSTM layers/timesteps + output Linear.
# Everything VMEM-resident; recurrent state lives in vregs (no scratch).
# ----------------------------------------------------------------------------
def lm_kernel(tok_ref, emb_tbl_ref, wcat_ref, b_ref, h0_ref, c0_ref,
              wlin_ref, blin_ref, logits_ref):
    num_layers = wcat_ref.shape[0]
    n_rows = tok_ref.shape[0]            # seq_len * padded_batch
    bp = h0_ref.shape[1]                 # padded batch (multiple of 8)
    seq_len = n_rows // bp
    vocab = emb_tbl_ref.shape[0]
    h4 = wcat_ref.shape[2]               # 4 * hidden
    hd = h4 // 4                         # hidden (== dims)

    # --- embedding as a one-hot matmul: (n, V) @ (V, D); no gather op needed ---
    tok = tok_ref[...]                                             # (n, 1) int32
    onehot = (tok == lax.broadcasted_iota(jnp.int32, (n_rows, vocab), 1)
              ).astype(jnp.float32)                                # (n, V)
    x_all = jnp.dot(onehot, emb_tbl_ref[...],
                    preferred_element_type=jnp.float32)            # (n, D)

    # Per-timestep inputs as SSA values (register-carried, no VMEM handoff).
    xs = [x_all[t * bp:(t + 1) * bp, :] for t in range(seq_len)]

    for layer in range(num_layers):       # static, small layer loop
        w = wcat_ref[layer]               # (2D, 4H): rows [0:D]=W_ih^T, [D:2D]=W_hh^T
        bias = b_ref[layer]               # (1, 4H)
        h = h0_ref[layer]                 # (Bp, H)  -- carried in vregs
        c = c0_ref[layer]                 # (Bp, H)
        outs = []
        # Fully unrolled; the dependency graph is exact SSA, so the scheduler can
        # wavefront across layers (cell (l,t) only needs (l,t-1) and (l-1,t)).
        for t in range(seq_len):
            xh = jnp.concatenate([xs[t], h], axis=1)               # (Bp, 2D), K<=128
            gates = jnp.dot(xh, w,
                            preferred_element_type=jnp.float32) + bias   # (Bp, 4H)
            sig = jax.nn.sigmoid(gates)   # one full-vreg EUP pass (g-quarter unused)
            i_g = sig[:, 0:hd]
            f_g = sig[:, hd:2 * hd]
            o_g = sig[:, 3 * hd:4 * hd]
            g_g = jnp.tanh(gates[:, 2 * hd:3 * hd])
            c = f_g * c + i_g * g_g
            h = o_g * jnp.tanh(c)
            outs.append(h)
        xs = outs                          # this layer's outputs = next layer's inputs

    # --- fused output Linear: (n, H) @ (H, V) + (1, V); V=128 lane-dense store ---
    out_all = jnp.concatenate(xs, axis=0)                          # (n, H)
    logits_ref[...] = (jnp.dot(out_all, wlin_ref[...],
                               preferred_element_type=jnp.float32)
                       + blin_ref[...])


def run_language_model(tok2d, emb_table, w_cat, b, h0_p, c0_p, lin_w_t, lin_b):
    n_rows = tok2d.shape[0]
    vocab = lin_w_t.shape[1]
    vmem = pl.BlockSpec(memory_space=pltpu.MemorySpace.VMEM)
    return pl.pallas_call(
        lm_kernel,
        out_shape=jax.ShapeDtypeStruct((n_rows, vocab), jnp.float32),
        in_specs=[vmem] * 8,
        out_specs=vmem,
    )(tok2d, emb_table, w_cat, b, h0_p, c0_p, lin_w_t, lin_b)


# ----------------------------------------------------------------------------
# Parameter construction (mirrors LanguageModel.init_weights, fused gate layout)
# ----------------------------------------------------------------------------
def init_params(key, dims, vocab, num_layers, init_val=0.05):
    ks = jax.random.split(key, 7)
    u = lambda k, shape: jax.random.uniform(k, shape, jnp.float32,
                                            minval=-init_val, maxval=init_val)

    emb_table = u(ks[0], (vocab, dims))

    # LSTM weights, PyTorch gate order (i, f, g, o) fused along the output axis and
    # pre-transposed to (in_features, 4*hidden) so the kernel does plain `x @ W`.
    w_ih_t = u(ks[1], (num_layers, dims, 4 * dims))   # layer0 in = dims == hidden
    w_hh_t = u(ks[2], (num_layers, dims, 4 * dims))
    b_ih = u(ks[3], (num_layers, 4 * dims))
    b_hh = u(ks[4], (num_layers, 4 * dims))
    # init_weights: forget-gate bias rows [H:2H] zeroed in both b_ih and b_hh
    b_ih = b_ih.at[:, dims:2 * dims].set(0.0)
    b_hh = b_hh.at[:, dims:2 * dims].set(0.0)
    b = (b_ih + b_hh)[:, None, :]                     # (L, 1, 4H)

    # Fused recurrent weight: [W_ih^T ; W_hh^T] stacked along K so each step is a
    # single K = 2*D (<= one MXU pass) contraction.
    w_cat = jnp.concatenate([w_ih_t, w_hh_t], axis=1)  # (L, 2D, 4H)

    lin_w_t = u(ks[5], (vocab, dims)).T               # (D, V)
    bound = 1.0 / np.sqrt(dims)                       # nn.Linear default bias init
    lin_b = jax.random.uniform(ks[6], (1, vocab), jnp.float32,
                               minval=-bound, maxval=bound)
    return emb_table, w_cat, b, lin_w_t, lin_b


# ----------------------------------------------------------------------------
# Forward (eval path): only tiny int/state pads stay in the wrapper.
# ----------------------------------------------------------------------------
def language_model_forward(x_tokens, states, params, train=False):
    emb_table, w_cat, b, lin_w_t, lin_b = params
    h0, c0 = states
    seq_len, batch = x_tokens.shape
    vocab = lin_w_t.shape[1]

    # pad batch to the sublane width so in-kernel vreg ops are unmasked
    bp = ((batch + _SUBLANE - 1) // _SUBLANE) * _SUBLANE
    pad = bp - batch
    tok_p = jnp.pad(x_tokens, ((0, 0), (0, pad)))           # pad token id 0 (valid row)
    tok2d = tok_p.reshape(seq_len * bp, 1).astype(jnp.int32)
    h0_p = jnp.pad(h0, ((0, 0), (0, pad), (0, 0)))
    c0_p = jnp.pad(c0, ((0, 0), (0, pad), (0, 0)))

    logits_p = run_language_model(tok2d, emb_table, w_cat, b,
                                  h0_p, c0_p, lin_w_t, lin_b)   # (S*bp, V)
    logits = (logits_p.reshape(seq_len, bp, vocab)[:, :batch, :]
              .reshape(seq_len * batch, vocab))

    # reference returns the *input* states, detached
    detached = tuple(lax.stop_gradient(s) for s in states)
    return logits, detached


# ----------------------------------------------------------------------------
# Pure-JAX reference (same math, no Pallas) for a correctness check.
# ----------------------------------------------------------------------------
def _reference_forward(x_tokens, states, params):
    emb_table, w_cat, b, lin_w_t, lin_b = params
    h0, c0 = states
    num_layers, _, dims = h0.shape
    w_ih_t = w_cat[:, :dims, :]
    w_hh_t = w_cat[:, dims:, :]
    x = jnp.take(emb_table, x_tokens, axis=0)
    for l in range(num_layers):
        h, c = h0[l], c0[l]
        outs = []
        for t in range(x.shape[0]):
            g = x[t] @ w_ih_t[l] + h @ w_hh_t[l] + b[l]
            i_g = jax.nn.sigmoid(g[:, :dims])
            f_g = jax.nn.sigmoid(g[:, dims:2 * dims])
            g_g = jnp.tanh(g[:, 2 * dims:3 * dims])
            o_g = jax.nn.sigmoid(g[:, 3 * dims:])
            c = f_g * c + i_g * g_g
            h = o_g * jnp.tanh(c)
            outs.append(h)
        x = jnp.stack(outs, axis=0)
    return x.reshape(-1, dims) @ lin_w_t + lin_b


if __name__ == "__main__":
    SEQ, BATCH, DIMS, VOCAB, NUM_LAYERS = 8, 2, 32, 128, 2

    key = jax.random.PRNGKey(0)
    k_tok, k_h, k_c, k_par = jax.random.split(key, 4)

    x_tokens = jax.random.randint(k_tok, (SEQ, BATCH), 0, VOCAB, dtype=jnp.int32)
    h0 = jax.random.normal(k_h, (NUM_LAYERS, BATCH, DIMS), jnp.float32) * 0.1
    c0 = jax.random.normal(k_c, (NUM_LAYERS, BATCH, DIMS), jnp.float32) * 0.1

    params = init_params(k_par, DIMS, VOCAB, NUM_LAYERS, init_val=0.05)

    fwd = jax.jit(language_model_forward, static_argnames=("train",))
    logits, states_out = fwd(x_tokens, (h0, c0), params, train=False)
    logits = jax.block_until_ready(logits)

    assert logits.shape == (SEQ * BATCH, VOCAB)
    assert states_out[0].shape == (NUM_LAYERS, BATCH, DIMS)

    ref = _reference_forward(x_tokens, (h0, c0), params)
    np.testing.assert_allclose(np.asarray(logits), np.asarray(ref),
                               rtol=2e-4, atol=2e-4)
    print("KERNEL_OK")
</pallas_src>

<mosaic_0001>
module attributes {stable_mosaic.version = 11 : i64} {
  func.func @lm_kernel(%arg0: memref<64x1xi32, #tpu.memory_space<vmem>>, %arg1: memref<128x32xf32, #tpu.memory_space<vmem>>, %arg2: memref<2x64x128xf32, #tpu.memory_space<vmem>>, %arg3: memref<2x1x128xf32, #tpu.memory_space<vmem>>, %arg4: memref<2x8x32xf32, #tpu.memory_space<vmem>>, %arg5: memref<2x8x32xf32, #tpu.memory_space<vmem>>, %arg6: memref<32x128xf32, #tpu.memory_space<vmem>>, %arg7: memref<1x128xf32, #tpu.memory_space<vmem>>, %arg8: memref<64x128xf32, #tpu.memory_space<vmem>>) attributes {dimension_semantics = [], scalar_prefetch = 0 : i64, scratch_operands = 0 : i64, tpu.core_type = #tpu.core_type<tc>} {
    %c0 = arith.constant 0 : index
    %c0_0 = arith.constant 0 : index
    %0 = vector.load %arg0[%c0, %c0_0] : memref<64x1xi32, #tpu.memory_space<vmem>>, vector<64x1xi32>
    %1 = tpu.iota {dimensions = array<i32: 1>} : vector<64x128xi32>
    %2 = vector.broadcast %0 : vector<64x1xi32> to vector<64x128xi32>
    %3 = arith.cmpi eq, %2, %1 : vector<64x128xi32>
    %4 = arith.extui %3 : vector<64x128xi1> to vector<64x128xi32>
    %5 = arith.sitofp %4 : vector<64x128xi32> to vector<64x128xf32>
    %c0_1 = arith.constant 0 : index
    %c0_2 = arith.constant 0 : index
    %6 = vector.load %arg1[%c0_1, %c0_2] : memref<128x32xf32, #tpu.memory_space<vmem>>, vector<128x32xf32>
    %cst = arith.constant dense<0.000000e+00> : vector<64x32xf32>
    %7 = tpu.matmul %5, %6, %cst {dimension_numbers = #tpu.dot_dimension_numbers<[1], [0], [0], [1], [0, 0, 1, 1], [], []>} : vector<64x128xf32>, vector<128x32xf32>, vector<64x32xf32> -> vector<64x32xf32>
    %8 = vector.extract_strided_slice %7 {offsets = [0, 0], sizes = [8, 32], strides = [1, 1]} : vector<64x32xf32> to vector<8x32xf32>
    %9 = vector.extract_strided_slice %7 {offsets = [8, 0], sizes = [8, 32], strides = [1, 1]} : vector<64x32xf32> to vector<8x32xf32>
    %10 = vector.extract_strided_slice %7 {offsets = [16, 0], sizes = [8, 32], strides = [1, 1]} : vector<64x32xf32> to vector<8x32xf32>
    %11 = vector.extract_strided_slice %7 {offsets = [24, 0], sizes = [8, 32], strides = [1, 1]} : vector<64x32xf32> to vector<8x32xf32>
    %12 = vector.extract_strided_slice %7 {offsets = [32, 0], sizes = [8, 32], strides = [1, 1]} : vector<64x32xf32> to vector<8x32xf32>
    %13 = vector.extract_strided_slice %7 {offsets = [40, 0], sizes = [8, 32], strides = [1, 1]} : vector<64x32xf32> to vector<8x32xf32>
    %14 = vector.extract_strided_slice %7 {offsets = [48, 0], sizes = [8, 32], strides = [1, 1]} : vector<64x32xf32> to vector<8x32xf32>
    %15 = vector.extract_strided_slice %7 {offsets = [56, 0], sizes = [8, 32], strides = [1, 1]} : vector<64x32xf32> to vector<8x32xf32>
    %c0_3 = arith.constant 0 : index
    %c0_4 = arith.constant 0 : index
    %c0_5 = arith.constant 0 : index
    %16 = vector.load %arg2[%c0_3, %c0_4, %c0_5] : memref<2x64x128xf32, #tpu.memory_space<vmem>>, vector<1x64x128xf32>
    %17 = vector.shape_cast %16 : vector<1x64x128xf32> to vector<64x128xf32>
    %c0_6 = arith.constant 0 : index
    %c0_7 = arith.constant 0 : index
    %c0_8 = arith.constant 0 : index
    %18 = vector.load %arg3[%c0_6, %c0_7, %c0_8] : memref<2x1x128xf32, #tpu.memory_space<vmem>>, vector<1x1x128xf32>
    %19 = vector.shape_cast %18 : vector<1x1x128xf32> to vector<1x128xf32>
    %c0_9 = arith.constant 0 : index
    %c0_10 = arith.constant 0 : index
    %c0_11 = arith.constant 0 : index
    %20 = vector.load %arg4[%c0_9, %c0_10, %c0_11] : memref<2x8x32xf32, #tpu.memory_space<vmem>>, vector<1x8x32xf32>
    %21 = vector.shape_cast %20 : vector<1x8x32xf32> to vector<8x32xf32>
    %c0_12 = arith.constant 0 : index
    %c0_13 = arith.constant 0 : index
    %c0_14 = arith.constant 0 : index
    %22 = vector.load %arg5[%c0_12, %c0_13, %c0_14] : memref<2x8x32xf32, #tpu.memory_space<vmem>>, vector<1x8x32xf32>
    %23 = vector.shape_cast %22 : vector<1x8x32xf32> to vector<8x32xf32>
    %24 = tpu.concatenate %8, %21 in 1 : vector<8x32xf32>, vector<8x32xf32> -> vector<8x64xf32>
    %cst_15 = arith.constant dense<0.000000e+00> : vector<8x128xf32>
    %25 = tpu.matmul %24, %17, %cst_15 {dimension_numbers = #tpu.dot_dimension_numbers<[1], [0], [0], [1], [0, 0, 1, 1], [], []>} : vector<8x64xf32>, vector<64x128xf32>, vector<8x128xf32> -> vector<8x128xf32>
    %26 = vector.broadcast %19 : vector<1x128xf32> to vector<8x128xf32>
    %27 = arith.addf %25, %26 : vector<8x128xf32>
    %28 = arith.negf %27 : vector<8x128xf32>
    %29 = math.exp %28 : vector<8x128xf32>
    %cst_16 = arith.constant 1.000000e+00 : f32
    %30 = vector.broadcast %cst_16 : f32 to vector<8x128xf32>
    %31 = arith.addf %30, %29 : vector<8x128xf32>
    %32 = arith.divf %30, %31 : vector<8x128xf32>
    %33 = vector.extract_strided_slice %32 {offsets = [0, 0], sizes = [8, 32], strides = [1, 1]} : vector<8x128xf32> to vector<8x32xf32>
    %34 = vector.extract_strided_slice %32 {offsets = [0, 32], sizes = [8, 32], strides = [1, 1]} : vector<8x128xf32> to vector<8x32xf32>
    %35 = vector.extract_strided_slice %32 {offsets = [0, 96], sizes = [8, 32], strides = [1, 1]} : vector<8x128xf32> to vector<8x32xf32>
    %36 = vector.extract_strided_slice %27 {offsets = [0, 64], sizes = [8, 32], strides = [1, 1]} : vector<8x128xf32> to vector<8x32xf32>
    %37 = math.tanh %36 : vector<8x32xf32>
    %38 = arith.mulf %34, %23 : vector<8x32xf32>
    %39 = arith.mulf %33, %37 : vector<8x32xf32>
    %40 = arith.addf %38, %39 : vector<8x32xf32>
    %41 = math.tanh %40 : vector<8x32xf32>
    %42 = arith.mulf %35, %41 : vector<8x32xf32>
    %43 = tpu.concatenate %9, %42 in 1 : vector<8x32xf32>, vector<8x32xf32> -> vector<8x64xf32>
    %cst_17 = arith.constant dense<0.000000e+00> : vector<8x128xf32>
    %44 = tpu.matmul %43, %17, %cst_17 {dimension_numbers = #tpu.dot_dimension_numbers<[1], [0], [0], [1], [0, 0, 1, 1], [], []>} : vector<8x64xf32>, vector<64x128xf32>, vector<8x128xf32> -> vector<8x128xf32>
    %45 = vector.broadcast %19 : vector<1x128xf32> to vector<8x128xf32>
    %46 = arith.addf %44, %45 : vector<8x128xf32>
    %47 = arith.negf %46 : vector<8x128xf32>
    %48 = math.exp %47 : vector<8x128xf32>
    %cst_18 = arith.constant 1.000000e+00 : f32
    %49 = vector.broadcast %cst_18 : f32 to vector<8x128xf32>
    %50 = arith.addf %49, %48 : vector<8x128xf32>
    %51 = arith.divf %49, %50 : vector<8x128xf32>
    %52 = vector.extract_strided_slice %51 {offsets = [0, 0], sizes = [8, 32], strides = [1, 1]} : vector<8x128xf32> to vector<8x32xf32>
    %53 = vector.extract_strided_slice %51 {offsets = [0, 32], sizes = [8, 32], strides = [1, 1]} : vector<8x128xf32> to vector<8x32xf32>
    %54 = vector.extract_strided_slice %51 {offsets = [0, 96], sizes = [8, 32], strides = [1, 1]} : vector<8x128xf32> to vector<8x32xf32>
    %55 = vector.extract_strided_slice %46 {offsets = [0, 64], sizes = [8, 32], strides = [1, 1]} : vector<8x128xf32> to vector<8x32xf32>
    %56 = math.tanh %55 : vector<8x32xf32>
    %57 = arith.mulf %53, %40 : vector<8x32xf32>
    %58 = arith.mulf %52, %56 : vector<8x32xf32>
    %59 = arith.addf %57, %58 : vector<8x32xf32>
    %60 = math.tanh %59 : vector<8x32xf32>
    %61 = arith.mulf %54, %60 : vector<8x32xf32>
    %62 = tpu.concatenate %10, %61 in 1 : vector<8x32xf32>, vector<8x32xf32> -> vector<8x64xf32>
    %cst_19 = arith.constant dense<0.000000e+00> : vector<8x128xf32>
    %63 = tpu.matmul %62, %17, %cst_19 {dimension_numbers = #tpu.dot_dimension_numbers<[1], [0], [0], [1], [0, 0, 1, 1], [], []>} : vector<8x64xf32>, vector<64x128xf32>, vector<8x128xf32> -> vector<8x128xf32>
    %64 = vector.broadcast %19 : vector<1x128xf32> to vector<8x128xf32>
    %65 = arith.addf %63, %64 : vector<8x128xf32>
    %66 = arith.negf %65 : vector<8x128xf32>
    %67 = math.exp %66 : vector<8x128xf32>
    %cst_20 = arith.constant 1.000000e+00 : f32
    %68 = vector.broadcast %cst_20 : f32 to vector<8x128xf32>
    %69 = arith.addf %68, %67 : vector<8x128xf32>
    %70 = arith.divf %68, %69 : vector<8x128xf32>
    %71 = vector.extract_strided_slice %70 {offsets = [0, 0], sizes = [8, 32], strides = [1, 1]} : vector<8x128xf32> to vector<8x32xf32>
    %72 = vector.extract_strided_slice %70 {offsets = [0, 32], sizes = [8, 32], strides = [1, 1]} : vector<8x128xf32> to vector<8x32xf32>
    %73 = vector.extract_strided_slice %70 {offsets = [0, 96], sizes = [8, 32], strides = [1, 1]} : vector<8x128xf32> to vector<8x32xf32>
    %74 = vector.extract_strided_slice %65 {offsets = [0, 64], sizes = [8, 32], strides = [1, 1]} : vector<8x128xf32> to vector<8x32xf32>
    %75 = math.tanh %74 : vector<8x32xf32>
    %76 = arith.mulf %72, %59 : vector<8x32xf32>
    %77 = arith.mulf %71, %75 : vector<8x32xf32>
    %78 = arith.addf %76, %77 : vector<8x32xf32>
    %79 = math.tanh %78 : vector<8x32xf32>
    %80 = arith.mulf %73, %79 : vector<8x32xf32>
    %81 = tpu.concatenate %11, %80 in 1 : vector<8x32xf32>, vector<8x32xf32> -> vector<8x64xf32>
    %cst_21 = arith.constant dense<0.000000e+00> : vector<8x128xf32>
    %82 = tpu.matmul %81, %17, %cst_21 {dimension_numbers = #tpu.dot_dimension_numbers<[1], [0], [0], [1], [0, 0, 1, 1], [], []>} : vector<8x64xf32>, vector<64x128xf32>, vector<8x128xf32> -> vector<8x128xf32>
    %83 = vector.broadcast %19 : vector<1x128xf32> to vector<8x128xf32>
    %84 = arith.addf %82, %83 : vector<8x128xf32>
    %85 = arith.negf %84 : vector<8x128xf32>
    %86 = math.exp %85 : vector<8x128xf32>
    %cst_22 = arith.constant 1.000000e+00 : f32
    %87 = vector.broadcast %cst_22 : f32 to vector<8x128xf32>
    %88 = arith.addf %87, %86 : vector<8x128xf32>
    %89 = arith.divf %87, %88 : vector<8x128xf32>
    %90 = vector.extract_strided_slice %89 {offsets = [0, 0], sizes = [8, 32], strides = [1, 1]} : vector<8x128xf32> to vector<8x32xf32>
    %91 = vector.extract_strided_slice %89 {offsets = [0, 32], sizes = [8, 32], strides = [1, 1]} : vector<8x128xf32> to vector<8x32xf32>
    %92 = vector.extract_strided_slice %89 {offsets = [0, 96], sizes = [8, 32], strides = [1, 1]} : vector<8x128xf32> to vector<8x32xf32>
    %93 = vector.extract_strided_slice %84 {offsets = [0, 64], sizes = [8, 32], strides = [1, 1]} : vector<8x128xf32> to vector<8x32xf32>
    %94 = math.tanh %93 : vector<8x32xf32>
    %95 = arith.mulf %91, %78 : vector<8x32xf32>
    %96 = arith.mulf %90, %94 : vector<8x32xf32>
    %97 = arith.addf %95, %96 : vector<8x32xf32>
    %98 = math.tanh %97 : vector<8x32xf32>
    %99 = arith.mulf %92, %98 : vector<8x32xf32>
    %100 = tpu.concatenate %12, %99 in 1 : vector<8x32xf32>, vector<8x32xf32> -> vector<8x64xf32>
    %cst_23 = arith.constant dense<0.000000e+00> : vector<8x128xf32>
    %101 = tpu.matmul %100, %17, %cst_23 {dimension_numbers = #tpu.dot_dimension_numbers<[1], [0], [0], [1], [0, 0, 1, 1], [], []>} : vector<8x64xf32>, vector<64x128xf32>, vector<8x128xf32> -> vector<8x128xf32>
    %102 = vector.broadcast %19 : vector<1x128xf32> to vector<8x128xf32>
    %103 = arith.addf %101, %102 : vector<8x128xf32>
    %104 = arith.negf %103 : vector<8x128xf32>
    %105 = math.exp %104 : vector<8x128xf32>
    %cst_24 = arith.constant 1.000000e+00 : f32
    %106 = vector.broadcast %cst_24 : f32 to vector<8x128xf32>
    %107 = arith.addf %106, %105 : vector<8x128xf32>
    %108 = arith.divf %106, %107 : vector<8x128xf32>
    %109 = vector.extract_strided_slice %108 {offsets = [0, 0], sizes = [8, 32], strides = [1, 1]} : vector<8x128xf32> to vector<8x32xf32>
    %110 = vector.extract_strided_slice %108 {offsets = [0, 32], sizes = [8, 32], strides = [1, 1]} : vector<8x128xf32> to vector<8x32xf32>
    %111 = vector.extract_strided_slice %108 {offsets = [0, 96], sizes = [8, 32], strides = [1, 1]} : vector<8x128xf32> to vector<8x32xf32>
    %112 = vector.extract_strided_slice %103 {offsets = [0, 64], sizes = [8, 32], strides = [1, 1]} : vector<8x128xf32> to vector<8x32xf32>
    %113 = math.tanh %112 : vector<8x32xf32>
    %114 = arith.mulf %110, %97 : vector<8x32xf32>
    %115 = arith.mulf %109, %113 : vector<8x32xf32>
    %116 = arith.addf %114, %115 : vector<8x32xf32>
    %117 = math.tanh %116 : vector<8x32xf32>
    %118 = arith.mulf %111, %117 : vector<8x32xf32>
    %119 = tpu.concatenate %13, %118 in 1 : vector<8x32xf32>, vector<8x32xf32> -> vector<8x64xf32>
    %cst_25 = arith.constant dense<0.000000e+00> : vector<8x128xf32>
    %120 = tpu.matmul %119, %17, %cst_25 {dimension_numbers = #tpu.dot_dimension_numbers<[1], [0], [0], [1], [0, 0, 1, 1], [], []>} : vector<8x64xf32>, vector<64x128xf32>, vector<8x128xf32> -> vector<8x128xf32>
    %121 = vector.broadcast %19 : vector<1x128xf32> to vector<8x128xf32>
    %122 = arith.addf %120, %121 : vector<8x128xf32>
    %123 = arith.negf %122 : vector<8x128xf32>
    %124 = math.exp %123 : vector<8x128xf32>
    %cst_26 = arith.constant 1.000000e+00 : f32
    %125 = vector.broadcast %cst_26 : f32 to vector<8x128xf32>
    %126 = arith.addf %125, %124 : vector<8x128xf32>
    %127 = arith.divf %125, %126 : vector<8x128xf32>
    %128 = vector.extract_strided_slice %127 {offsets = [0, 0], sizes = [8, 32], strides = [1, 1]} : vector<8x128xf32> to vector<8x32xf32>
    %129 = vector.extract_strided_slice %127 {offsets = [0, 32], sizes = [8, 32], strides = [1, 1]} : vector<8x128xf32> to vector<8x32xf32>
    %130 = vector.extract_strided_slice %127 {offsets = [0, 96], sizes = [8, 32], strides = [1, 1]} : vector<8x128xf32> to vector<8x32xf32>
    %131 = vector.extract_strided_slice %122 {offsets = [0, 64], sizes = [8, 32], strides = [1, 1]} : vector<8x128xf32> to vector<8x32xf32>
    %132 = math.tanh %131 : vector<8x32xf32>
    %133 = arith.mulf %129, %116 : vector<8x32xf32>
    %134 = arith.mulf %128, %132 : vector<8x32xf32>
    %135 = arith.addf %133, %134 : vector<8x32xf32>
    %136 = math.tanh %135 : vector<8x32xf32>
    %137 = arith.mulf %130, %136 : vector<8x32xf32>
    %138 = tpu.concatenate %14, %137 in 1 : vector<8x32xf32>, vector<8x32xf32> -> vector<8x64xf32>
    %cst_27 = arith.constant dense<0.000000e+00> : vector<8x128xf32>
    %139 = tpu.matmul %138, %17, %cst_27 {dimension_numbers = #tpu.dot_dimension_numbers<[1], [0], [0], [1], [0, 0, 1, 1], [], []>} : vector<8x64xf32>, vector<64x128xf32>, vector<8x128xf32> -> vector<8x128xf32>
    %140 = vector.broadcast %19 : vector<1x128xf32> to vector<8x128xf32>
    %141 = arith.addf %139, %140 : vector<8x128xf32>
    %142 = arith.negf %141 : vector<8x128xf32>
    %143 = math.exp %142 : vector<8x128xf32>
    %cst_28 = arith.constant 1.000000e+00 : f32
    %144 = vector.broadcast %cst_28 : f32 to vector<8x128xf32>
    %145 = arith.addf %144, %143 : vector<8x128xf32>
    %146 = arith.divf %144, %145 : vector<8x128xf32>
    %147 = vector.extract_strided_slice %146 {offsets = [0, 0], sizes = [8, 32], strides = [1, 1]} : vector<8x128xf32> to vector<8x32xf32>
    %148 = vector.extract_strided_slice %146 {offsets = [0, 32], sizes = [8, 32], strides = [1, 1]} : vector<8x128xf32> to vector<8x32xf32>
    %149 = vector.extract_strided_slice %146 {offsets = [0, 96], sizes = [8, 32], strides = [1, 1]} : vector<8x128xf32> to vector<8x32xf32>
    %150 = vector.extract_strided_slice %141 {offsets = [0, 64], sizes = [8, 32], strides = [1, 1]} : vector<8x128xf32> to vector<8x32xf32>
    %151 = math.tanh %150 : vector<8x32xf32>
    %152 = arith.mulf %148, %135 : vector<8x32xf32>
    %153 = arith.mulf %147, %151 : vector<8x32xf32>
    %154 = arith.addf %152, %153 : vector<8x32xf32>
    %155 = math.tanh %154 : vector<8x32xf32>
    %156 = arith.mulf %149, %155 : vector<8x32xf32>
    %157 = tpu.concatenate %15, %156 in 1 : vector<8x32xf32>, vector<8x32xf32> -> vector<8x64xf32>
    %cst_29 = arith.constant dense<0.000000e+00> : vector<8x128xf32>
    %158 = tpu.matmul %157, %17, %cst_29 {dimension_numbers = #tpu.dot_dimension_numbers<[1], [0], [0], [1], [0, 0, 1, 1], [], []>} : vector<8x64xf32>, vector<64x128xf32>, vector<8x128xf32> -> vector<8x128xf32>
    %159 = vector.broadcast %19 : vector<1x128xf32> to vector<8x128xf32>
    %160 = arith.addf %158, %159 : vector<8x128xf32>
    %161 = arith.negf %160 : vector<8x128xf32>
    %162 = math.exp %161 : vector<8x128xf32>
    %cst_30 = arith.constant 1.000000e+00 : f32
    %163 = vector.broadcast %cst_30 : f32 to vector<8x128xf32>
    %164 = arith.addf %163, %162 : vector<8x128xf32>
    %165 = arith.divf %163, %164 : vector<8x128xf32>
    %166 = vector.extract_strided_slice %165 {offsets = [0, 0], sizes = [8, 32], strides = [1, 1]} : vector<8x128xf32> to vector<8x32xf32>
    %167 = vector.extract_strided_slice %165 {offsets = [0, 32], sizes = [8, 32], strides = [1, 1]} : vector<8x128xf32> to vector<8x32xf32>
    %168 = vector.extract_strided_slice %165 {offsets = [0, 96], sizes = [8, 32], strides = [1, 1]} : vector<8x128xf32> to vector<8x32xf32>
    %169 = vector.extract_strided_slice %160 {offsets = [0, 64], sizes = [8, 32], strides = [1, 1]} : vector<8x128xf32> to vector<8x32xf32>
    %170 = math.tanh %169 : vector<8x32xf32>
    %171 = arith.mulf %167, %154 : vector<8x32xf32>
    %172 = arith.mulf %166, %170 : vector<8x32xf32>
    %173 = arith.addf %171, %172 : vector<8x32xf32>
    %174 = math.tanh %173 : vector<8x32xf32>
    %175 = arith.mulf %168, %174 : vector<8x32xf32>
    %c1 = arith.constant 1 : index
    %c0_31 = arith.constant 0 : index
    %c0_32 = arith.constant 0 : index
    %176 = vector.load %arg2[%c1, %c0_31, %c0_32] : memref<2x64x128xf32, #tpu.memory_space<vmem>>, vector<1x64x128xf32>
    %177 = vector.shape_cast %176 : vector<1x64x128xf32> to vector<64x128xf32>
    %c1_33 = arith.constant 1 : index
    %c0_34 = arith.constant 0 : index
    %c0_35 = arith.constant 0 : index
    %178 = vector.load %arg3[%c1_33, %c0_34, %c0_35] : memref<2x1x128xf32, #tpu.memory_space<vmem>>, vector<1x1x128xf32>
    %179 = vector.shape_cast %178 : vector<1x1x128xf32> to vector<1x128xf32>
    %c1_36 = arith.constant 1 : index
    %c0_37 = arith.constant 0 : index
    %c0_38 = arith.constant 0 : index
    %180 = vector.load %arg4[%c1_36, %c0_37, %c0_38] : memref<2x8x32xf32, #tpu.memory_space<vmem>>, vector<1x8x32xf32>
    %181 = vector.shape_cast %180 : vector<1x8x32xf32> to vector<8x32xf32>
    %c1_39 = arith.constant 1 : index
    %c0_40 = arith.constant 0 : index
    %c0_41 = arith.constant 0 : index
    %182 = vector.load %arg5[%c1_39, %c0_40, %c0_41] : memref<2x8x32xf32, #tpu.memory_space<vmem>>, vector<1x8x32xf32>
    %183 = vector.shape_cast %182 : vector<1x8x32xf32> to vector<8x32xf32>
    %184 = tpu.concatenate %42, %181 in 1 : vector<8x32xf32>, vector<8x32xf32> -> vector<8x64xf32>
    %cst_42 = arith.constant dense<0.000000e+00> : vector<8x128xf32>
    %185 = tpu.matmul %184, %177, %cst_42 {dimension_numbers = #tpu.dot_dimension_numbers<[1], [0], [0], [1], [0, 0, 1, 1], [], []>} : vector<8x64xf32>, vector<64x128xf32>, vector<8x128xf32> -> vector<8x128xf32>
    %186 = vector.broadcast %179 : vector<1x128xf32> to vector<8x128xf32>
    %187 = arith.addf %185, %186 : vector<8x128xf32>
    %188 = arith.negf %187 : vector<8x128xf32>
    %189 = math.exp %188 : vector<8x128xf32>
    %cst_43 = arith.constant 1.000000e+00 : f32
    %190 = vector.broadcast %cst_43 : f32 to vector<8x128xf32>
    %191 = arith.addf %190, %189 : vector<8x128xf32>
    %192 = arith.divf %190, %191 : vector<8x128xf32>
    %193 = vector.extract_strided_slice %192 {offsets = [0, 0], sizes = [8, 32], strides = [1, 1]} : vector<8x128xf32> to vector<8x32xf32>
    %194 = vector.extract_strided_slice %192 {offsets = [0, 32], sizes = [8, 32], strides = [1, 1]} : vector<8x128xf32> to vector<8x32xf32>
    %195 = vector.extract_strided_slice %192 {offsets = [0, 96], sizes = [8, 32], strides = [1, 1]} : vector<8x128xf32> to vector<8x32xf32>
    %196 = vector.extract_strided_slice %187 {offsets = [0, 64], sizes = [8, 32], strides = [1, 1]} : vector<8x128xf32> to vector<8x32xf32>
    %197 = math.tanh %196 : vector<8x32xf32>
    %198 = arith.mulf %194, %183 : vector<8x32xf32>
    %199 = arith.mulf %193, %197 : vector<8x32xf32>
    %200 = arith.addf %198, %199 : vector<8x32xf32>
    %201 = math.tanh %200 : vector<8x32xf32>
    %202 = arith.mulf %195, %201 : vector<8x32xf32>
    %203 = tpu.concatenate %61, %202 in 1 : vector<8x32xf32>, vector<8x32xf32> -> vector<8x64xf32>
    %cst_44 = arith.constant dense<0.000000e+00> : vector<8x128xf32>
    %204 = tpu.matmul %203, %177, %cst_44 {dimension_numbers = #tpu.dot_dimension_numbers<[1], [0], [0], [1], [0, 0, 1, 1], [], []>} : vector<8x64xf32>, vector<64x128xf32>, vector<8x128xf32> -> vector<8x128xf32>
    %205 = vector.broadcast %179 : vector<1x128xf32> to vector<8x128xf32>
    %206 = arith.addf %204, %205 : vector<8x128xf32>
    %207 = arith.negf %206 : vector<8x128xf32>
    %208 = math.exp %207 : vector<8x128xf32>
    %cst_45 = arith.constant 1.000000e+00 : f32
    %209 = vector.broadcast %cst_45 : f32 to vector<8x128xf32>
    %210 = arith.addf %209, %208 : vector<8x128xf32>
    %211 = arith.divf %209, %210 : vector<8x128xf32>
    %212 = vector.extract_strided_slice %211 {offsets = [0, 0], sizes = [8, 32], strides = [1, 1]} : vector<8x128xf32> to vector<8x32xf32>
    %213 = vector.extract_strided_slice %211 {offsets = [0, 32], sizes = [8, 32], strides = [1, 1]} : vector<8x128xf32> to vector<8x32xf32>
    %214 = vector.extract_strided_slice %211 {offsets = [0, 96], sizes = [8, 32], strides = [1, 1]} : vector<8x128xf32> to vector<8x32xf32>
    %215 = vector.extract_strided_slice %206 {offsets = [0, 64], sizes = [8, 32], strides = [1, 1]} : vector<8x128xf32> to vector<8x32xf32>
    %216 = math.tanh %215 : vector<8x32xf32>
    %217 = arith.mulf %213, %200 : vector<8x32xf32>
    %218 = arith.mulf %212, %216 : vector<8x32xf32>
    %219 = arith.addf %217, %218 : vector<8x32xf32>
    %220 = math.tanh %219 : vector<8x32xf32>
    %221 = arith.mulf %214, %220 : vector<8x32xf32>
    %222 = tpu.concatenate %80, %221 in 1 : vector<8x32xf32>, vector<8x32xf32> -> vector<8x64xf32>
    %cst_46 = arith.constant dense<0.000000e+00> : vector<8x128xf32>
    %223 = tpu.matmul %222, %177, %cst_46 {dimension_numbers = #tpu.dot_dimension_numbers<[1], [0], [0], [1], [0, 0, 1, 1], [], []>} : vector<8x64xf32>, vector<64x128xf32>, vector<8x128xf32> -> vector<8x128xf32>
    %224 = vector.broadcast %179 : vector<1x128xf32> to vector<8x128xf32>
    %225 = arith.addf %223, %224 : vector<8x128xf32>
    %226 = arith.negf %225 : vector<8x128xf32>
    %227 = math.exp %226 : vector<8x128xf32>
    %cst_47 = arith.constant 1.000000e+00 : f32
    %228 = vector.broadcast %cst_47 : f32 to vector<8x128xf32>
    %229 = arith.addf %228, %227 : vector<8x128xf32>
    %230 = arith.divf %228, %229 : vector<8x128xf32>
    %231 = vector.extract_strided_slice %230 {offsets = [0, 0], sizes = [8, 32], strides = [1, 1]} : vector<8x128xf32> to vector<8x32xf32>
    %232 = vector.extract_strided_slice %230 {offsets = [0, 32], sizes = [8, 32], strides = [1, 1]} : vector<8x128xf32> to vector<8x32xf32>
    %233 = vector.extract_strided_slice %230 {offsets = [0, 96], sizes = [8, 32], strides = [1, 1]} : vector<8x128xf32> to vector<8x32xf32>
    %234 = vector.extract_strided_slice %225 {offsets = [0, 64], sizes = [8, 32], strides = [1, 1]} : vector<8x128xf32> to vector<8x32xf32>
    %235 = math.tanh %234 : vector<8x32xf32>
    %236 = arith.mulf %232, %219 : vector<8x32xf32>
    %237 = arith.mulf %231, %235 : vector<8x32xf32>
    %238 = arith.addf %236, %237 : vector<8x32xf32>
    %239 = math.tanh %238 : vector<8x32xf32>
    %240 = arith.mulf %233, %239 : vector<8x32xf32>
    %241 = tpu.concatenate %99, %240 in 1 : vector<8x32xf32>, vector<8x32xf32> -> vector<8x64xf32>
    %cst_48 = arith.constant dense<0.000000e+00> : vector<8x128xf32>
    %242 = tpu.matmul %241, %177, %cst_48 {dimension_numbers = #tpu.dot_dimension_numbers<[1], [0], [0], [1], [0, 0, 1, 1], [], []>} : vector<8x64xf32>, vector<64x128xf32>, vector<8x128xf32> -> vector<8x128xf32>
    %243 = vector.broadcast %179 : vector<1x128xf32> to vector<8x128xf32>
    %244 = arith.addf %242, %243 : vector<8x128xf32>
    %245 = arith.negf %244 : vector<8x128xf32>
    %246 = math.exp %245 : vector<8x128xf32>
    %cst_49 = arith.constant 1.000000e+00 : f32
    %247 = vector.broadcast %cst_49 : f32 to vector<8x128xf32>
    %248 = arith.addf %247, %246 : vector<8x128xf32>
    %249 = arith.divf %247, %248 : vector<8x128xf32>
    %250 = vector.extract_strided_slice %249 {offsets = [0, 0], sizes = [8, 32], strides = [1, 1]} : vector<8x128xf32> to vector<8x32xf32>
    %251 = vector.extract_strided_slice %249 {offsets = [0, 32], sizes = [8, 32], strides = [1, 1]} : vector<8x128xf32> to vector<8x32xf32>
    %252 = vector.extract_strided_slice %249 {offsets = [0, 96], sizes = [8, 32], strides = [1, 1]} : vector<8x128xf32> to vector<8x32xf32>
    %253 = vector.extract_strided_slice %244 {offsets = [0, 64], sizes = [8, 32], strides = [1, 1]} : vector<8x128xf32> to vector<8x32xf32>
    %254 = math.tanh %253 : vector<8x32xf32>
    %255 = arith.mulf %251, %238 : vector<8x32xf32>
    %256 = arith.mulf %250, %254 : vector<8x32xf32>
    %257 = arith.addf %255, %256 : vector<8x32xf32>
    %258 = math.tanh %257 : vector<8x32xf32>
    %259 = arith.mulf %252, %258 : vector<8x32xf32>
    %260 = tpu.concatenate %118, %259 in 1 : vector<8x32xf32>, vector<8x32xf32> -> vector<8x64xf32>
    %cst_50 = arith.constant dense<0.000000e+00> : vector<8x128xf32>
    %261 = tpu.matmul %260, %177, %cst_50 {dimension_numbers = #tpu.dot_dimension_numbers<[1], [0], [0], [1], [0, 0, 1, 1], [], []>} : vector<8x64xf32>, vector<64x128xf32>, vector<8x128xf32> -> vector<8x128xf32>
    %262 = vector.broadcast %179 : vector<1x128xf32> to vector<8x128xf32>
    %263 = arith.addf %261, %262 : vector<8x128xf32>
    %264 = arith.negf %263 : vector<8x128xf32>
    %265 = math.exp %264 : vector<8x128xf32>
    %cst_51 = arith.constant 1.000000e+00 : f32
    %266 = vector.broadcast %cst_51 : f32 to vector<8x128xf32>
    %267 = arith.addf %266, %265 : vector<8x128xf32>
    %268 = arith.divf %266, %267 : vector<8x128xf32>
    %269 = vector.extract_strided_slice %268 {offsets = [0, 0], sizes = [8, 32], strides = [1, 1]} : vector<8x128xf32> to vector<8x32xf32>
    %270 = vector.extract_strided_slice %268 {offsets = [0, 32], sizes = [8, 32], strides = [1, 1]} : vector<8x128xf32> to vector<8x32xf32>
    %271 = vector.extract_strided_slice %268 {offsets = [0, 96], sizes = [8, 32], strides = [1, 1]} : vector<8x128xf32> to vector<8x32xf32>
    %272 = vector.extract_strided_slice %263 {offsets = [0, 64], sizes = [8, 32], strides = [1, 1]} : vector<8x128xf32> to vector<8x32xf32>
    %273 = math.tanh %272 : vector<8x32xf32>
    %274 = arith.mulf %270, %257 : vector<8x32xf32>
    %275 = arith.mulf %269, %273 : vector<8x32xf32>
    %276 = arith.addf %274, %275 : vector<8x32xf32>
    %277 = math.tanh %276 : vector<8x32xf32>
    %278 = arith.mulf %271, %277 : vector<8x32xf32>
    %279 = tpu.concatenate %137, %278 in 1 : vector<8x32xf32>, vector<8x32xf32> -> vector<8x64xf32>
    %cst_52 = arith.constant dense<0.000000e+00> : vector<8x128xf32>
    %280 = tpu.matmul %279, %177, %cst_52 {dimension_numbers = #tpu.dot_dimension_numbers<[1], [0], [0], [1], [0, 0, 1, 1], [], []>} : vector<8x64xf32>, vector<64x128xf32>, vector<8x128xf32> -> vector<8x128xf32>
    %281 = vector.broadcast %179 : vector<1x128xf32> to vector<8x128xf32>
    %282 = arith.addf %280, %281 : vector<8x128xf32>
    %283 = arith.negf %282 : vector<8x128xf32>
    %284 = math.exp %283 : vector<8x128xf32>
    %cst_53 = arith.constant 1.000000e+00 : f32
    %285 = vector.broadcast %cst_53 : f32 to vector<8x128xf32>
    %286 = arith.addf %285, %284 : vector<8x128xf32>
    %287 = arith.divf %285, %286 : vector<8x128xf32>
    %288 = vector.extract_strided_slice %287 {offsets = [0, 0], sizes = [8, 32], strides = [1, 1]} : vector<8x128xf32> to vector<8x32xf32>
    %289 = vector.extract_strided_slice %287 {offsets = [0, 32], sizes = [8, 32], strides = [1, 1]} : vector<8x128xf32> to vector<8x32xf32>
    %290 = vector.extract_strided_slice %287 {offsets = [0, 96], sizes = [8, 32], strides = [1, 1]} : vector<8x128xf32> to vector<8x32xf32>
    %291 = vector.extract_strided_slice %282 {offsets = [0, 64], sizes = [8, 32], strides = [1, 1]} : vector<8x128xf32> to vector<8x32xf32>
    %292 = math.tanh %291 : vector<8x32xf32>
    %293 = arith.mulf %289, %276 : vector<8x32xf32>
    %294 = arith.mulf %288, %292 : vector<8x32xf32>
    %295 = arith.addf %293, %294 : vector<8x32xf32>
    %296 = math.tanh %295 : vector<8x32xf32>
    %297 = arith.mulf %290, %296 : vector<8x32xf32>
    %298 = tpu.concatenate %156, %297 in 1 : vector<8x32xf32>, vector<8x32xf32> -> vector<8x64xf32>
    %cst_54 = arith.constant dense<0.000000e+00> : vector<8x128xf32>
    %299 = tpu.matmul %298, %177, %cst_54 {dimension_numbers = #tpu.dot_dimension_numbers<[1], [0], [0], [1], [0, 0, 1, 1], [], []>} : vector<8x64xf32>, vector<64x128xf32>, vector<8x128xf32> -> vector<8x128xf32>
    %300 = vector.broadcast %179 : vector<1x128xf32> to vector<8x128xf32>
    %301 = arith.addf %299, %300 : vector<8x128xf32>
    %302 = arith.negf %301 : vector<8x128xf32>
    %303 = math.exp %302 : vector<8x128xf32>
    %cst_55 = arith.constant 1.000000e+00 : f32
    %304 = vector.broadcast %cst_55 : f32 to vector<8x128xf32>
    %305 = arith.addf %304, %303 : vector<8x128xf32>
    %306 = arith.divf %304, %305 : vector<8x128xf32>
    %307 = vector.extract_strided_slice %306 {offsets = [0, 0], sizes = [8, 32], strides = [1, 1]} : vector<8x128xf32> to vector<8x32xf32>
    %308 = vector.extract_strided_slice %306 {offsets = [0, 32], sizes = [8, 32], strides = [1, 1]} : vector<8x128xf32> to vector<8x32xf32>
    %309 = vector.extract_strided_slice %306 {offsets = [0, 96], sizes = [8, 32], strides = [1, 1]} : vector<8x128xf32> to vector<8x32xf32>
    %310 = vector.extract_strided_slice %301 {offsets = [0, 64], sizes = [8, 32], strides = [1, 1]} : vector<8x128xf32> to vector<8x32xf32>
    %311 = math.tanh %310 : vector<8x32xf32>
    %312 = arith.mulf %308, %295 : vector<8x32xf32>
    %313 = arith.mulf %307, %311 : vector<8x32xf32>
    %314 = arith.addf %312, %313 : vector<8x32xf32>
    %315 = math.tanh %314 : vector<8x32xf32>
    %316 = arith.mulf %309, %315 : vector<8x32xf32>
    %317 = tpu.concatenate %175, %316 in 1 : vector<8x32xf32>, vector<8x32xf32> -> vector<8x64xf32>
    %cst_56 = arith.constant dense<0.000000e+00> : vector<8x128xf32>
    %318 = tpu.matmul %317, %177, %cst_56 {dimension_numbers = #tpu.dot_dimension_numbers<[1], [0], [0], [1], [0, 0, 1, 1], [], []>} : vector<8x64xf32>, vector<64x128xf32>, vector<8x128xf32> -> vector<8x128xf32>
    %319 = vector.broadcast %179 : vector<1x128xf32> to vector<8x128xf32>
    %320 = arith.addf %318, %319 : vector<8x128xf32>
    %321 = arith.negf %320 : vector<8x128xf32>
    %322 = math.exp %321 : vector<8x128xf32>
    %cst_57 = arith.constant 1.000000e+00 : f32
    %323 = vector.broadcast %cst_57 : f32 to vector<8x128xf32>
    %324 = arith.addf %323, %322 : vector<8x128xf32>
    %325 = arith.divf %323, %324 : vector<8x128xf32>
    %326 = vector.extract_strided_slice %325 {offsets = [0, 0], sizes = [8, 32], strides = [1, 1]} : vector<8x128xf32> to vector<8x32xf32>
    %327 = vector.extract_strided_slice %325 {offsets = [0, 32], sizes = [8, 32], strides = [1, 1]} : vector<8x128xf32> to vector<8x32xf32>
    %328 = vector.extract_strided_slice %325 {offsets = [0, 96], sizes = [8, 32], strides = [1, 1]} : vector<8x128xf32> to vector<8x32xf32>
    %329 = vector.extract_strided_slice %320 {offsets = [0, 64], sizes = [8, 32], strides = [1, 1]} : vector<8x128xf32> to vector<8x32xf32>
    %330 = math.tanh %329 : vector<8x32xf32>
    %331 = arith.mulf %327, %314 : vector<8x32xf32>
    %332 = arith.mulf %326, %330 : vector<8x32xf32>
    %333 = arith.addf %331, %332 : vector<8x32xf32>
    %334 = math.tanh %333 : vector<8x32xf32>
    %335 = arith.mulf %328, %334 : vector<8x32xf32>
    %336 = tpu.concatenate %202, %221, %240, %259, %278, %297, %316, %335 in 0 : vector<8x32xf32>, vector<8x32xf32>, vector<8x32xf32>, vector<8x32xf32>, vector<8x32xf32>, vector<8x32xf32>, vector<8x32xf32>, vector<8x32xf32> -> vector<64x32xf32>
    %c0_58 = arith.constant 0 : index
    %c0_59 = arith.constant 0 : index
    %337 = vector.load %arg6[%c0_58, %c0_59] : memref<32x128xf32, #tpu.memory_space<vmem>>, vector<32x128xf32>
    %cst_60 = arith.constant dense<0.000000e+00> : vector<64x128xf32>
    %338 = tpu.matmul %336, %337, %cst_60 {dimension_numbers = #tpu.dot_dimension_numbers<[1], [0], [0], [1], [0, 0, 1, 1], [], []>} : vector<64x32xf32>, vector<32x128xf32>, vector<64x128xf32> -> vector<64x128xf32>
    %c0_61 = arith.constant 0 : index
    %c0_62 = arith.constant 0 : index
    %339 = vector.load %arg7[%c0_61, %c0_62] : memref<1x128xf32, #tpu.memory_space<vmem>>, vector<1x128xf32>
    %340 = vector.broadcast %339 : vector<1x128xf32> to vector<64x128xf32>
    %341 = arith.addf %338, %340 : vector<64x128xf32>
    %c0_63 = arith.constant 0 : index
    %c0_64 = arith.constant 0 : index
    %342 = vector.load %arg8[%c0_63, %c0_64] : memref<64x128xf32, #tpu.memory_space<vmem>>, vector<64x128xf32>
    tpu.vector_store %arg8[%c0_63, %c0_64], %341 {strides = array<i32>} : memref<64x128xf32, #tpu.memory_space<vmem>>, vector<64x128xf32>,
    return
  }
}

</mosaic_0001>

<llo_original>
// kernel: language_model_forward.1
$region0: #{language_model_forward.1}
  #allocation0 [shape = 'u32[]', space=smem, size = 0x4, offset = 0x4, fixed_abs, tag = 'smem constant byte address 0x4 - core index']
  #allocation1 [shape = 'u32[72,128]{1,0:T(1,128)}', space=vmem, size = 0x9000, scoped, tag = 'internal scratch']
  %s0 = inlined_call_operand.vmem [shape: s32[64,1], index: 0, kind: input, shape index: {}]
  %s1 = inlined_call_operand.vmem [shape: f32[128,32], index: 1, kind: input, shape index: {}]
  %s2 = inlined_call_operand.vmem [shape: f32[2,64,128], index: 2, kind: input, shape index: {}]
  %s3 = inlined_call_operand.vmem [shape: f32[2,1,128], index: 3, kind: input, shape index: {}]
  %s4 = inlined_call_operand.vmem [shape: f32[2,8,32], index: 4, kind: input, shape index: {}]
  %s5 = inlined_call_operand.vmem [shape: f32[2,8,32], index: 5, kind: input, shape index: {}]
  %s6 = inlined_call_operand.vmem [shape: f32[32,128], index: 6, kind: input, shape index: {}]
  %s7 = inlined_call_operand.vmem [shape: f32[1,128], index: 7, kind: input, shape index: {}]
  %s8 = inlined_call_operand.vmem [shape: f32[64,128], index: 8, kind: output, shape index: {}]
  %s9 = sld [smem:[#allocation0]]
  $region42: #{language_model_forward.1} parent=0
    _
  %s11 = ssub.s32 1, %s9
  %s12 = scalar_select 0, %s11, %s9
  // Predicated region
  $region2: #{language_model_forward.1} parent=0 // pred_check
    _
  $region3: #{language_model_forward.1} parent=0 // pred_check_branch
    %14 = sbr.rel (0) target = $region5
  $region4: #{language_model_forward.1} parent=0 // pred_region
    _
  $region5: #{language_model_forward.1} parent=0 // pred_fallthru
    _
  // Predicated region
  $region6: #{language_model_forward.1} parent=0 // pred_check
    _
  $region7: #{language_model_forward.1} parent=0 // pred_check_branch
    %16 = sbr.rel (0) target = $region9
  $region8: #{language_model_forward.1} parent=0 // pred_region
    _
  $region9: #{language_model_forward.1} parent=0 // pred_fallthru
    _
  // Predicated region
  $region10: #{language_model_forward.1} parent=0 // pred_check
    _
  $region11: #{language_model_forward.1} parent=0 // pred_check_branch
    %18 = sbr.rel (0) target = $region13
  $region12: #{language_model_forward.1} parent=0 // pred_region
    _
  $region13: #{language_model_forward.1} parent=0 // pred_fallthru
    _
  // Predicated region
  $region14: #{language_model_forward.1} parent=0 // pred_check
    _
  $region15: #{language_model_forward.1} parent=0 // pred_check_branch
    %20 = sbr.rel (0) target = $region17
  $region16: #{language_model_forward.1} parent=0 // pred_region
    _
  $region17: #{language_model_forward.1} parent=0 // pred_fallthru
    _
  // Predicated region
  $region18: #{language_model_forward.1} parent=0 // pred_check
    _
  $region19: #{language_model_forward.1} parent=0 // pred_check_branch
    %22 = sbr.rel (0) target = $region21
  $region20: #{language_model_forward.1} parent=0 // pred_region
    _
  $region21: #{language_model_forward.1} parent=0 // pred_fallthru
    _
  // Predicated region
  $region22: #{language_model_forward.1} parent=0 // pred_check
    _
  $region23: #{language_model_forward.1} parent=0 // pred_check_branch
    %24 = sbr.rel (0) target = $region25
  $region24: #{language_model_forward.1} parent=0 // pred_region
    _
  $region25: #{language_model_forward.1} parent=0 // pred_fallthru
    _
  // Predicated region
  $region26: #{language_model_forward.1} parent=0 // pred_check
    _
  $region27: #{language_model_forward.1} parent=0 // pred_check_branch
    %26 = sbr.rel (0) target = $region29
  $region28: #{language_model_forward.1} parent=0 // pred_region
    _
  $region29: #{language_model_forward.1} parent=0 // pred_fallthru
    _
  // Predicated region
  $region30: #{language_model_forward.1} parent=0 // pred_check
    _
  $region31: #{language_model_forward.1} parent=0 // pred_check_branch
    %28 = sbr.rel (0) target = $region33
  $region32: #{language_model_forward.1} parent=0 // pred_region
    _
  $region33: #{language_model_forward.1} parent=0 // pred_fallthru
    _
  %v29 = vld [vmem:[%s0] sm:$0xff]
  %v30 = vld [vmem:[%s0 + $0x8] sm:$0xff]
  %v31 = vld [vmem:[%s0 + $0x10] sm:$0xff]
  %v32 = vld [vmem:[%s0 + $0x18] sm:$0xff]
  %v33 = vld [vmem:[%s0 + $0x20] sm:$0xff]
  %v34 = vld [vmem:[%s0 + $0x28] sm:$0xff]
  %v35 = vld [vmem:[%s0 + $0x30] sm:$0xff]
  %v36 = vld [vmem:[%s0 + $0x38] sm:$0xff]
  %v37 = vlaneseq
  %v38 = vand.u32 %v37, 127
  %39 = vset.pattern.permute.xlu0 0
  %40 = vperm.xlu0 %39, %v29
  %v41 = vpop.permute.xlu0 %40
  %42 = vset.pattern.permute.xlu0 0
  %43 = vperm.xlu0 %42, %v30
  %v44 = vpop.permute.xlu0 %43
  %45 = vset.pattern.permute.xlu0 0
  %46 = vperm.xlu0 %45, %v31
  %v47 = vpop.permute.xlu0 %46
  %48 = vset.pattern.permute.xlu0 0
  %49 = vperm.xlu0 %48, %v32
  %v50 = vpop.permute.xlu0 %49
  %51 = vset.pattern.permute.xlu0 0
  %52 = vperm.xlu0 %51, %v33
  %v53 = vpop.permute.xlu0 %52
  %54 = vset.pattern.permute.xlu0 0
  %55 = vperm.xlu0 %54, %v34
  %v56 = vpop.permute.xlu0 %55
  %57 = vset.pattern.permute.xlu0 0
  %58 = vperm.xlu0 %57, %v35
  %v59 = vpop.permute.xlu0 %58
  %60 = vset.pattern.permute.xlu0 0
  %61 = vperm.xlu0 %60, %v36
  %v62 = vpop.permute.xlu0 %61
  %vm63 = vcmp.eq.s32.totalorder %v41, %v38
  %vm64 = vcmp.eq.s32.totalorder %v44, %v38
  %vm65 = vcmp.eq.s32.totalorder %v47, %v38
  %vm66 = vcmp.eq.s32.totalorder %v50, %v38
  %vm67 = vcmp.eq.s32.totalorder %v53, %v38
  %vm68 = vcmp.eq.s32.totalorder %v56, %v38
  %vm69 = vcmp.eq.s32.totalorder %v59, %v38
  %vm70 = vcmp.eq.s32.totalorder %v62, %v38
  %v71 = vsel %vm63, 1, 0
  %v72 = vsel %vm64, 1, 0
  %v73 = vsel %vm65, 1, 0
  %v74 = vsel %vm66, 1, 0
  %v75 = vsel %vm67, 1, 0
  %v76 = vsel %vm68, 1, 0
  %v77 = vsel %vm69, 1, 0
  %v78 = vsel %vm70, 1, 0
  %v79 = vcvt.s32.f32 %v71
  %v80 = vcvt.s32.f32 %v72
  %v81 = vcvt.s32.f32 %v73
  %v82 = vcvt.s32.f32 %v74
  %v83 = vcvt.s32.f32 %v75
  %v84 = vcvt.s32.f32 %v76
  %v85 = vcvt.s32.f32 %v77
  %v86 = vcvt.s32.f32 %v78
  %v87 = vld [vmem:[%s1] sm:$0xff]
  %v88 = vld [vmem:[%s1 + $0x8] sm:$0xff]
  %v89 = vld [vmem:[%s1 + $0x10] sm:$0xff]
  %v90 = vld [vmem:[%s1 + $0x18] sm:$0xff]
  %v91 = vld [vmem:[%s1 + $0x20] sm:$0xff]
  %v92 = vld [vmem:[%s1 + $0x28] sm:$0xff]
  %v93 = vld [vmem:[%s1 + $0x30] sm:$0xff]
  %v94 = vld [vmem:[%s1 + $0x38] sm:$0xff]
  %v95 = vld [vmem:[%s1 + $0x40] sm:$0xff]
  %v96 = vld [vmem:[%s1 + $0x48] sm:$0xff]
  %v97 = vld [vmem:[%s1 + $0x50] sm:$0xff]
  %v98 = vld [vmem:[%s1 + $0x58] sm:$0xff]
  %v99 = vld [vmem:[%s1 + $0x60] sm:$0xff]
  %v100 = vld [vmem:[%s1 + $0x68] sm:$0xff]
  %v101 = vld [vmem:[%s1 + $0x70] sm:$0xff]
  %v102 = vld [vmem:[%s1 + $0x78] sm:$0xff]
  %103 = vmatpush.msra.mxu0 %v102
  %104 = vmatpush.msra.mxu0 %v101
  %105 = vmatpush.msra.mxu0 %v100
  %106 = vmatpush.msra.mxu0 %v99
  %107 = vmatpush.msra.mxu0 %v98
  %108 = vmatpush.msra.mxu0 %v97
  %109 = vmatpush.msra.mxu0 %v96
  %110 = vmatpush.msra.mxu0 %v95
  %111 = vmatpush.msra.mxu0 %v94
  %112 = vmatpush.msra.mxu0 %v93
  %113 = vmatpush.msra.mxu0 %v92
  %114 = vmatpush.msra.mxu0 %v91
  %115 = vmatpush.msra.mxu0 %v90
  %116 = vmatpush.msra.mxu0 %v89
  %117 = vmatpush.msra.mxu0 %v88
  %118 = vmatpush.msra.mxu0 %v87
  %119 = vmatmul.f32.gmra.mxu0 %v79
  %v120 = vpop.f32.mrf.mxu0
  %v121 = vadd.f32 0.0, %v120
  %122 = vmatmul.f32.gmra.mxu0 %v80
  %v123 = vpop.f32.mrf.mxu0
  %v124 = vadd.f32 0.0, %v123
  %125 = vmatmul.f32.gmra.mxu0 %v81
  %v126 = vpop.f32.mrf.mxu0
  %v127 = vadd.f32 0.0, %v126
  %128 = vmatmul.f32.gmra.mxu0 %v82
  %v129 = vpop.f32.mrf.mxu0
  %v130 = vadd.f32 0.0, %v129
  %131 = vmatmul.f32.gmra.mxu0 %v83
  %v132 = vpop.f32.mrf.mxu0
  %v133 = vadd.f32 0.0, %v132
  %134 = vmatmul.f32.gmra.mxu0 %v84
  %v135 = vpop.f32.mrf.mxu0
  %v136 = vadd.f32 0.0, %v135
  %137 = vmatmul.f32.gmra.mxu0 %v85
  %v138 = vpop.f32.mrf.mxu0
  %v139 = vadd.f32 0.0, %v138
  %140 = vmatmul.f32.gmra.mxu0 %v86
  %v141 = vpop.f32.mrf.mxu0
  %v142 = vadd.f32 0.0, %v141
  %143 = vdwg.mxu0
  %v144 = vld [vmem:[%s2] sm:$0xff]
  %v145 = vld [vmem:[%s2 + $0x8] sm:$0xff]
  %v146 = vld [vmem:[%s2 + $0x10] sm:$0xff]
  %v147 = vld [vmem:[%s2 + $0x18] sm:$0xff]
  %v148 = vld [vmem:[%s2 + $0x20] sm:$0xff]
  %v149 = vld [vmem:[%s2 + $0x28] sm:$0xff]
  %v150 = vld [vmem:[%s2 + $0x30] sm:$0xff]
  %v151 = vld [vmem:[%s2 + $0x38] sm:$0xff]
  %v152 = vld [vmem:[%s3] sm:$0x1]
  %v153 = vld [vmem:[%s4] sm:$0xff]
  %v154 = vld [vmem:[%s5] sm:$0xff]
  %156 = vrot.lane.b32.xlu0 %v153, 32
  %v157 = vpop.permute.xlu0 %156
  %vm159 = vcmask 261120
  %v160 = vsel %vm159, %v121, %v157
  %v162 = vperm.slane %v152, 0
  %vm164 = vcmask 523264
  %v166 = vsel %vm164, %v160, 0
  %168 = vmatpush.msra.mxu0 0.0
  %169 = vmatpush.msra.mxu0 0.0
  %170 = vmatpush.msra.mxu0 0.0
  %171 = vmatpush.msra.mxu0 0.0
  %172 = vmatpush.msra.mxu0 0.0
  %173 = vmatpush.msra.mxu0 0.0
  %174 = vmatpush.msra.mxu0 0.0
  %175 = vmatpush.msra.mxu0 0.0
  %176 = vmatpush.msra.mxu0 %v151
  %177 = vmatpush.msra.mxu0 %v150
  %178 = vmatpush.msra.mxu0 %v149
  %179 = vmatpush.msra.mxu0 %v148
  %180 = vmatpush.msra.mxu0 %v147
  %181 = vmatpush.msra.mxu0 %v146
  %182 = vmatpush.msra.mxu0 %v145
  %183 = vmatpush.msra.mxu0 %v144
  %184 = vmatmul.f32.gmra.mxu0 %v166
  %v185 = vpop.f32.mrf.mxu0
  %v186 = vadd.f32 %v162, %v185
  %187 = vdwg.mxu0
  %v188 = vxor.u32 %v186, 2147483648
  %v189 = vmul.f32 %v188, 1.442695
  %v190 = vpow.pop %v189
  %v191 = vadd.f32 %v190, 1.0
  %v192 = vrcp.pop %v191
  %v193 = vmul.f32 %v191, %v192
  %v194 = vsub.f32 1.0, %v193
  %v195 = vmul.f32 %v192, %v194
  %v196 = vadd.f32 %v192, %v195
  %vm197 = vweird.f32 %v191
  %vm198 = vweird.f32 %v192
  %vm199 = vmor %vm197, %vm198
  %v200 = vsel %vm199, %v192, %v196
  %v201 = vand.u32 2147483647, %v191
  %vm202 = vcmp.eq.f32.partialorder %v201, 8.507059e+37
  %v203 = vand.u32 %v191, 2147483648
  %v204 = vor.u32 1.1754944e-38, %v203
  %v205 = vsel %vm202, %v204, %v200
  %v206 = vmul.f32 1.0, %v205
  %v207 = vtanh.pop %v186
  %209 = vrot.lane.b32.xlu0 %v154, 32
  %v210 = vpop.permute.xlu0 %209
  %v212 = vmul.f32 %v206, %v210
  %214 = vrot.lane.b32.xlu0 %v207, 64
  %v215 = vpop.permute.xlu0 %214
  %v217 = vmul.f32 %v206, %v215
  %219 = vrot.lane.b32.xlu0 %v217, 32
  %v220 = vpop.permute.xlu0 %219
  %v222 = vadd.f32 %v212, %v220
  %v223 = vtanh.pop %v222
  %225 = vrot.lane.b32.xlu0 %v223, 64
  %v226 = vpop.permute.xlu0 %225
  %v228 = vmul.f32 %v206, %v226
  %230 = vrot.lane.b32.xlu0 %v228, 64
  %v231 = vpop.permute.xlu0 %230
  %v233 = vsel %vm159, %v124, %v231
  %v235 = vsel %vm164, %v233, 0
  %237 = vmatpush.msra.mxu0 0.0
  %238 = vmatpush.msra.mxu0 0.0
  %239 = vmatpush.msra.mxu0 0.0
  %240 = vmatpush.msra.mxu0 0.0
  %241 = vmatpush.msra.mxu0 0.0
  %242 = vmatpush.msra.mxu0 0.0
  %243 = vmatpush.msra.mxu0 0.0
  %244 = vmatpush.msra.mxu0 0.0
  %245 = vmatpush.msra.mxu0 %v151
  %246 = vmatpush.msra.mxu0 %v150
  %247 = vmatpush.msra.mxu0 %v149
  %248 = vmatpush.msra.mxu0 %v148
  %249 = vmatpush.msra.mxu0 %v147
  %250 = vmatpush.msra.mxu0 %v146
  %251 = vmatpush.msra.mxu0 %v145
  %252 = vmatpush.msra.mxu0 %v144
  %253 = vmatmul.f32.gmra.mxu0 %v235
  %v254 = vpop.f32.mrf.mxu0
  %v255 = vadd.f32 %v162, %v254
  %256 = vdwg.mxu0
  %v257 = vxor.u32 %v255, 2147483648
  %v258 = vmul.f32 %v257, 1.442695
  %v259 = vpow.pop %v258
  %v260 = vadd.f32 %v259, 1.0
  %v261 = vrcp.pop %v260
  %v262 = vmul.f32 %v260, %v261
  %v263 = vsub.f32 1.0, %v262
  %v264 = vmul.f32 %v261, %v263
  %v265 = vadd.f32 %v261, %v264
  %vm266 = vweird.f32 %v260
  %vm267 = vweird.f32 %v261
  %vm268 = vmor %vm266, %vm267
  %v269 = vsel %vm268, %v261, %v265
  %v270 = vand.u32 2147483647, %v260
  %vm271 = vcmp.eq.f32.partialorder %v270, 8.507059e+37
  %v272 = vand.u32 %v260, 2147483648
  %v273 = vor.u32 1.1754944e-38, %v272
  %v274 = vsel %vm271, %v273, %v269
  %v275 = vmul.f32 1.0, %v274
  %v276 = vtanh.pop %v255
  %v277 = vmul.f32 %v275, %v222
  %279 = vrot.lane.b32.xlu0 %v276, 64
  %v280 = vpop.permute.xlu0 %279
  %v282 = vmul.f32 %v275, %v280
  %284 = vrot.lane.b32.xlu0 %v282, 32
  %v285 = vpop.permute.xlu0 %284
  %v287 = vadd.f32 %v277, %v285
  %v288 = vtanh.pop %v287
  %290 = vrot.lane.b32.xlu0 %v288, 64
  %v291 = vpop.permute.xlu0 %290
  %v293 = vmul.f32 %v275, %v291
  %295 = vrot.lane.b32.xlu0 %v293, 64
  %v296 = vpop.permute.xlu0 %295
  %v298 = vsel %vm159, %v127, %v296
  %v300 = vsel %vm164, %v298, 0
  %302 = vmatpush.msra.mxu0 0.0
  %303 = vmatpush.msra.mxu0 0.0
  %304 = vmatpush.msra.mxu0 0.0
  %305 = vmatpush.msra.mxu0 0.0
  %306 = vmatpush.msra.mxu0 0.0
  %307 = vmatpush.msra.mxu0 0.0
  %308 = vmatpush.msra.mxu0 0.0
  %309 = vmatpush.msra.mxu0 0.0
  %310 = vmatpush.msra.mxu0 %v151
  %311 = vmatpush.msra.mxu0 %v150
  %312 = vmatpush.msra.mxu0 %v149
  %313 = vmatpush.msra.mxu0 %v148
  %314 = vmatpush.msra.mxu0 %v147
  %315 = vmatpush.msra.mxu0 %v146
  %316 = vmatpush.msra.mxu0 %v145
  %317 = vmatpush.msra.mxu0 %v144
  %318 = vmatmul.f32.gmra.mxu0 %v300
  %v319 = vpop.f32.mrf.mxu0
  %v320 = vadd.f32 %v162, %v319
  %321 = vdwg.mxu0
  %v322 = vxor.u32 %v320, 2147483648
  %v323 = vmul.f32 %v322, 1.442695
  %v324 = vpow.pop %v323
  %v325 = vadd.f32 %v324, 1.0
  %v326 = vrcp.pop %v325
  %v327 = vmul.f32 %v325, %v326
  %v328 = vsub.f32 1.0, %v327
  %v329 = vmul.f32 %v326, %v328
  %v330 = vadd.f32 %v326, %v329
  %vm331 = vweird.f32 %v325
  %vm332 = vweird.f32 %v326
  %vm333 = vmor %vm331, %vm332
  %v334 = vsel %vm333, %v326, %v330
  %v335 = vand.u32 2147483647, %v325
  %vm336 = vcmp.eq.f32.partialorder %v335, 8.507059e+37
  %v337 = vand.u32 %v325, 2147483648
  %v338 = vor.u32 1.1754944e-38, %v337
  %v339 = vsel %vm336, %v338, %v334
  %v340 = vmul.f32 1.0, %v339
  %v341 = vtanh.pop %v320
  %v342 = vmul.f32 %v340, %v287
  %344 = vrot.lane.b32.xlu0 %v341, 64
  %v345 = vpop.permute.xlu0 %344
  %v347 = vmul.f32 %v340, %v345
  %349 = vrot.lane.b32.xlu0 %v347, 32
  %v350 = vpop.permute.xlu0 %349
  %v352 = vadd.f32 %v342, %v350
  %v353 = vtanh.pop %v352
  %355 = vrot.lane.b32.xlu0 %v353, 64
  %v356 = vpop.permute.xlu0 %355
  %v358 = vmul.f32 %v340, %v356
  %360 = vrot.lane.b32.xlu0 %v358, 64
  %v361 = vpop.permute.xlu0 %360
  %v363 = vsel %vm159, %v130, %v361
  %v365 = vsel %vm164, %v363, 0
  %367 = vmatpush.msra.mxu0 0.0
  %368 = vmatpush.msra.mxu0 0.0
  %369 = vmatpush.msra.mxu0 0.0
  %370 = vmatpush.msra.mxu0 0.0
  %371 = vmatpush.msra.mxu0 0.0
  %372 = vmatpush.msra.mxu0 0.0
  %373 = vmatpush.msra.mxu0 0.0
  %374 = vmatpush.msra.mxu0 0.0
  %375 = vmatpush.msra.mxu0 %v151
  %376 = vmatpush.msra.mxu0 %v150
  %377 = vmatpush.msra.mxu0 %v149
  %378 = vmatpush.msra.mxu0 %v148
  %379 = vmatpush.msra.mxu0 %v147
  %380 = vmatpush.msra.mxu0 %v146
  %381 = vmatpush.msra.mxu0 %v145
  %382 = vmatpush.msra.mxu0 %v144
  %383 = vmatmul.f32.gmra.mxu0 %v365
  %v384 = vpop.f32.mrf.mxu0
  %v385 = vadd.f32 %v162, %v384
  %386 = vdwg.mxu0
  %v387 = vxor.u32 %v385, 2147483648
  %v388 = vmul.f32 %v387, 1.442695
  %v389 = vpow.pop %v388
  %v390 = vadd.f32 %v389, 1.0
  %v391 = vrcp.pop %v390
  %v392 = vmul.f32 %v390, %v391
  %v393 = vsub.f32 1.0, %v392
  %v394 = vmul.f32 %v391, %v393
  %v395 = vadd.f32 %v391, %v394
  %vm396 = vweird.f32 %v390
  %vm397 = vweird.f32 %v391
  %vm398 = vmor %vm396, %vm397
  %v399 = vsel %vm398, %v391, %v395
  %v400 = vand.u32 2147483647, %v390
  %vm401 = vcmp.eq.f32.partialorder %v400, 8.507059e+37
  %v402 = vand.u32 %v390, 2147483648
  %v403 = vor.u32 1.1754944e-38, %v402
  %v404 = vsel %vm401, %v403, %v399
  %v405 = vmul.f32 1.0, %v404
  %v406 = vtanh.pop %v385
  %v407 = vmul.f32 %v405, %v352
  %409 = vrot.lane.b32.xlu0 %v406, 64
  %v410 = vpop.permute.xlu0 %409
  %v412 = vmul.f32 %v405, %v410
  %414 = vrot.lane.b32.xlu0 %v412, 32
  %v415 = vpop.permute.xlu0 %414
  %v417 = vadd.f32 %v407, %v415
  %v418 = vtanh.pop %v417
  %420 = vrot.lane.b32.xlu0 %v418, 64
  %v421 = vpop.permute.xlu0 %420
  %v423 = vmul.f32 %v405, %v421
  %425 = vrot.lane.b32.xlu0 %v423, 64
  %v426 = vpop.permute.xlu0 %425
  %v428 = vsel %vm159, %v133, %v426
  %v430 = vsel %vm164, %v428, 0
  %432 = vmatpush.msra.mxu0 0.0
  %433 = vmatpush.msra.mxu0 0.0
  %434 = vmatpush.msra.mxu0 0.0
  %435 = vmatpush.msra.mxu0 0.0
  %436 = vmatpush.msra.mxu0 0.0
  %437 = vmatpush.msra.mxu0 0.0
  %438 = vmatpush.msra.mxu0 0.0
  %439 = vmatpush.msra.mxu0 0.0
  %440 = vmatpush.msra.mxu0 %v151
  %441 = vmatpush.msra.mxu0 %v150
  %442 = vmatpush.msra.mxu0 %v149
  %443 = vmatpush.msra.mxu0 %v148
  %444 = vmatpush.msra.mxu0 %v147
  %445 = vmatpush.msra.mxu0 %v146
  %446 = vmatpush.msra.mxu0 %v145
  %447 = vmatpush.msra.mxu0 %v144
  %448 = vmatmul.f32.gmra.mxu0 %v430
  %v449 = vpop.f32.mrf.mxu0
  %v450 = vadd.f32 %v162, %v449
  %451 = vdwg.mxu0
  %v452 = vxor.u32 %v450, 2147483648
  %v453 = vmul.f32 %v452, 1.442695
  %v454 = vpow.pop %v453
  %v455 = vadd.f32 %v454, 1.0
  %v456 = vrcp.pop %v455
  %v457 = vmul.f32 %v455, %v456
  %v458 = vsub.f32 1.0, %v457
  %v459 = vmul.f32 %v456, %v458
  %v460 = vadd.f32 %v456, %v459
  %vm461 = vweird.f32 %v455
  %vm462 = vweird.f32 %v456
  %vm463 = vmor %vm461, %vm462
  %v464 = vsel %vm463, %v456, %v460
  %v465 = vand.u32 2147483647, %v455
  %vm466 = vcmp.eq.f32.partialorder %v465, 8.507059e+37
  %v467 = vand.u32 %v455, 2147483648
  %v468 = vor.u32 1.1754944e-38, %v467
  %v469 = vsel %vm466, %v468, %v464
  %v470 = vmul.f32 1.0, %v469
  %v471 = vtanh.pop %v450
  %v472 = vmul.f32 %v470, %v417
  %474 = vrot.lane.b32.xlu0 %v471, 64
  %v475 = vpop.permute.xlu0 %474
  %v477 = vmul.f32 %v470, %v475
  %479 = vrot.lane.b32.xlu0 %v477, 32
  %v480 = vpop.permute.xlu0 %479
  %v482 = vadd.f32 %v472, %v480
  %v483 = vtanh.pop %v482
  %485 = vrot.lane.b32.xlu0 %v483, 64
  %v486 = vpop.permute.xlu0 %485
  %v488 = vmul.f32 %v470, %v486
  %490 = vrot.lane.b32.xlu0 %v488, 64
  %v491 = vpop.permute.xlu0 %490
  %v493 = vsel %vm159, %v136, %v491
  %v495 = vsel %vm164, %v493, 0
  %497 = vmatpush.msra.mxu0 0.0
  %498 = vmatpush.msra.mxu0 0.0
  %499 = vmatpush.msra.mxu0 0.0
  %500 = vmatpush.msra.mxu0 0.0
  %501 = vmatpush.msra.mxu0 0.0
  %502 = vmatpush.msra.mxu0 0.0
  %503 = vmatpush.msra.mxu0 0.0
  %504 = vmatpush.msra.mxu0 0.0
  %505 = vmatpush.msra.mxu0 %v151
  %506 = vmatpush.msra.mxu0 %v150
  %507 = vmatpush.msra.mxu0 %v149
  %508 = vmatpush.msra.mxu0 %v148
  %509 = vmatpush.msra.mxu0 %v147
  %510 = vmatpush.msra.mxu0 %v146
  %511 = vmatpush.msra.mxu0 %v145
  %512 = vmatpush.msra.mxu0 %v144
  %513 = vmatmul.f32.gmra.mxu0 %v495
  %v514 = vpop.f32.mrf.mxu0
  %v515 = vadd.f32 %v162, %v514
  %516 = vdwg.mxu0
  %v517 = vxor.u32 %v515, 2147483648
  %v518 = vmul.f32 %v517, 1.442695
  %v519 = vpow.pop %v518
  %v520 = vadd.f32 %v519, 1.0
  %v521 = vrcp.pop %v520
  %v522 = vmul.f32 %v520, %v521
  %v523 = vsub.f32 1.0, %v522
  %v524 = vmul.f32 %v521, %v523
  %v525 = vadd.f32 %v521, %v524
  %vm526 = vweird.f32 %v520
  %vm527 = vweird.f32 %v521
  %vm528 = vmor %vm526, %vm527
  %v529 = vsel %vm528, %v521, %v525
  %v530 = vand.u32 2147483647, %v520
  %vm531 = vcmp.eq.f32.partialorder %v530, 8.507059e+37
  %v532 = vand.u32 %v520, 2147483648
  %v533 = vor.u32 1.1754944e-38, %v532
  %v534 = vsel %vm531, %v533, %v529
  %v535 = vmul.f32 1.0, %v534
  %v536 = vtanh.pop %v515
  %v537 = vmul.f32 %v535, %v482
  %539 = vrot.lane.b32.xlu0 %v536, 64
  %v540 = vpop.permute.xlu0 %539
  %v542 = vmul.f32 %v535, %v540
  %544 = vrot.lane.b32.xlu0 %v542, 32
  %v545 = vpop.permute.xlu0 %544
  %v547 = vadd.f32 %v537, %v545
  %v548 = vtanh.pop %v547
  %550 = vrot.lane.b32.xlu0 %v548, 64
  %v551 = vpop.permute.xlu0 %550
  %v553 = vmul.f32 %v535, %v551
  %555 = vrot.lane.b32.xlu0 %v553, 64
  %v556 = vpop.permute.xlu0 %555
  %v558 = vsel %vm159, %v139, %v556
  %v560 = vsel %vm164, %v558, 0
  %562 = vmatpush.msra.mxu0 0.0
  %563 = vmatpush.msra.mxu0 0.0
  %564 = vmatpush.msra.mxu0 0.0
  %565 = vmatpush.msra.mxu0 0.0
  %566 = vmatpush.msra.mxu0 0.0
  %567 = vmatpush.msra.mxu0 0.0
  %568 = vmatpush.msra.mxu0 0.0
  %569 = vmatpush.msra.mxu0 0.0
  %570 = vmatpush.msra.mxu0 %v151
  %571 = vmatpush.msra.mxu0 %v150
  %572 = vmatpush.msra.mxu0 %v149
  %573 = vmatpush.msra.mxu0 %v148
  %574 = vmatpush.msra.mxu0 %v147
  %575 = vmatpush.msra.mxu0 %v146
  %576 = vmatpush.msra.mxu0 %v145
  %577 = vmatpush.msra.mxu0 %v144
  %578 = vmatmul.f32.gmra.mxu0 %v560
  %v579 = vpop.f32.mrf.mxu0
  %v580 = vadd.f32 %v162, %v579
  %581 = vdwg.mxu0
  %v582 = vxor.u32 %v580, 2147483648
  %v583 = vmul.f32 %v582, 1.442695
  %v584 = vpow.pop %v583
  %v585 = vadd.f32 %v584, 1.0
  %v586 = vrcp.pop %v585
  %v587 = vmul.f32 %v585, %v586
  %v588 = vsub.f32 1.0, %v587
  %v589 = vmul.f32 %v586, %v588
  %v590 = vadd.f32 %v586, %v589
  %vm591 = vweird.f32 %v585
  %vm592 = vweird.f32 %v586
  %vm593 = vmor %vm591, %vm592
  %v594 = vsel %vm593, %v586, %v590
  %v595 = vand.u32 2147483647, %v585
  %vm596 = vcmp.eq.f32.partialorder %v595, 8.507059e+37
  %v597 = vand.u32 %v585, 2147483648
  %v598 = vor.u32 1.1754944e-38, %v597
  %v599 = vsel %vm596, %v598, %v594
  %v600 = vmul.f32 1.0, %v599
  %v601 = vtanh.pop %v580
  %v602 = vmul.f32 %v600, %v547
  %604 = vrot.lane.b32.xlu0 %v601, 64
  %v605 = vpop.permute.xlu0 %604
  %v607 = vmul.f32 %v600, %v605
  %609 = vrot.lane.b32.xlu0 %v607, 32
  %v610 = vpop.permute.xlu0 %609
  %v612 = vadd.f32 %v602, %v610
  %v613 = vtanh.pop %v612
  %615 = vrot.lane.b32.xlu0 %v613, 64
  %v616 = vpop.permute.xlu0 %615
  %v618 = vmul.f32 %v600, %v616
  %620 = vrot.lane.b32.xlu0 %v618, 64
  %v621 = vpop.permute.xlu0 %620
  %v623 = vsel %vm159, %v142, %v621
  %v625 = vsel %vm164, %v623, 0
  %627 = vmatpush.msra.mxu0 0.0
  %628 = vmatpush.msra.mxu0 0.0
  %629 = vmatpush.msra.mxu0 0.0
  %630 = vmatpush.msra.mxu0 0.0
  %631 = vmatpush.msra.mxu0 0.0
  %632 = vmatpush.msra.mxu0 0.0
  %633 = vmatpush.msra.mxu0 0.0
  %634 = vmatpush.msra.mxu0 0.0
  %635 = vmatpush.msra.mxu0 %v151
  %636 = vmatpush.msra.mxu0 %v150
  %637 = vmatpush.msra.mxu0 %v149
  %638 = vmatpush.msra.mxu0 %v148
  %639 = vmatpush.msra.mxu0 %v147
  %640 = vmatpush.msra.mxu0 %v146
  %641 = vmatpush.msra.mxu0 %v145
  %642 = vmatpush.msra.mxu0 %v144
  %643 = vmatmul.f32.gmra.mxu0 %v625
  %v644 = vpop.f32.mrf.mxu0
  %v645 = vadd.f32 %v162, %v644
  %646 = vdwg.mxu0
  %v647 = vxor.u32 %v645, 2147483648
  %v648 = vmul.f32 %v647, 1.442695
  %v649 = vpow.pop %v648
  %v650 = vadd.f32 %v649, 1.0
  %v651 = vrcp.pop %v650
  %v652 = vmul.f32 %v650, %v651
  %v653 = vsub.f32 1.0, %v652
  %v654 = vmul.f32 %v651, %v653
  %v655 = vadd.f32 %v651, %v654
  %vm656 = vweird.f32 %v650
  %vm657 = vweird.f32 %v651
  %vm658 = vmor %vm656, %vm657
  %v659 = vsel %vm658, %v651, %v655
  %v660 = vand.u32 2147483647, %v650
  %vm661 = vcmp.eq.f32.partialorder %v660, 8.507059e+37
  %v662 = vand.u32 %v650, 2147483648
  %v663 = vor.u32 1.1754944e-38, %v662
  %v664 = vsel %vm661, %v663, %v659
  %v665 = vmul.f32 1.0, %v664
  %v666 = vtanh.pop %v645
  %v667 = vmul.f32 %v665, %v612
  %669 = vrot.lane.b32.xlu0 %v666, 64
  %v670 = vpop.permute.xlu0 %669
  %v672 = vmul.f32 %v665, %v670
  %674 = vrot.lane.b32.xlu0 %v672, 32
  %v675 = vpop.permute.xlu0 %674
  %v677 = vadd.f32 %v667, %v675
  %v678 = vtanh.pop %v677
  %680 = vrot.lane.b32.xlu0 %v678, 64
  %v681 = vpop.permute.xlu0 %680
  %v683 = vmul.f32 %v665, %v681
  %s684 = scalar_lea.vmem %s2, 64
  %v685 = vld [vmem:[%s684] sm:$0xff]
  %v686 = vld [vmem:[%s684 + $0x8] sm:$0xff]
  %v687 = vld [vmem:[%s684 + $0x10] sm:$0xff]
  %v688 = vld [vmem:[%s684 + $0x18] sm:$0xff]
  %v689 = vld [vmem:[%s684 + $0x20] sm:$0xff]
  %v690 = vld [vmem:[%s684 + $0x28] sm:$0xff]
  %v691 = vld [vmem:[%s684 + $0x30] sm:$0xff]
  %v692 = vld [vmem:[%s684 + $0x38] sm:$0xff]
  %s693 = scalar_lea.vmem %s3, 1
  %v694 = vld [vmem:[%s693] sm:$0x1]
  %s695 = scalar_lea.vmem %s4, 8
  %v696 = vld [vmem:[%s695] sm:$0xff]
  %s697 = scalar_lea.vmem %s5, 8
  %v698 = vld [vmem:[%s697] sm:$0xff]
  %699 = vrot.lane.b32.xlu0 %v228, 32
  %v700 = vpop.permute.xlu0 %699
  %703 = vrot.lane.b32.xlu0 %v696, 32
  %v704 = vpop.permute.xlu0 %703
  %v706 = vsel %vm159, %v700, %v704
  %v708 = vperm.slane %v694, 0
  %v711 = vsel %vm164, %v706, 0
  %713 = vmatpush.msra.mxu0 0.0
  %714 = vmatpush.msra.mxu0 0.0
  %715 = vmatpush.msra.mxu0 0.0
  %716 = vmatpush.msra.mxu0 0.0
  %717 = vmatpush.msra.mxu0 0.0
  %718 = vmatpush.msra.mxu0 0.0
  %719 = vmatpush.msra.mxu0 0.0
  %720 = vmatpush.msra.mxu0 0.0
  %721 = vmatpush.msra.mxu0 %v692
  %722 = vmatpush.msra.mxu0 %v691
  %723 = vmatpush.msra.mxu0 %v690
  %724 = vmatpush.msra.mxu0 %v689
  %725 = vmatpush.msra.mxu0 %v688
  %726 = vmatpush.msra.mxu0 %v687
  %727 = vmatpush.msra.mxu0 %v686
  %728 = vmatpush.msra.mxu0 %v685
  %729 = vmatmul.f32.gmra.mxu0 %v711
  %v730 = vpop.f32.mrf.mxu0
  %v731 = vadd.f32 %v708, %v730
  %732 = vdwg.mxu0
  %v733 = vxor.u32 %v731, 2147483648
  %v734 = vmul.f32 %v733, 1.442695
  %v735 = vpow.pop %v734
  %v736 = vadd.f32 %v735, 1.0
  %v737 = vrcp.pop %v736
  %v738 = vmul.f32 %v736, %v737
  %v739 = vsub.f32 1.0, %v738
  %v740 = vmul.f32 %v737, %v739
  %v741 = vadd.f32 %v737, %v740
  %vm742 = vweird.f32 %v736
  %vm743 = vweird.f32 %v737
  %vm744 = vmor %vm742, %vm743
  %v745 = vsel %vm744, %v737, %v741
  %v746 = vand.u32 2147483647, %v736
  %vm747 = vcmp.eq.f32.partialorder %v746, 8.507059e+37
  %v748 = vand.u32 %v736, 2147483648
  %v749 = vor.u32 1.1754944e-38, %v748
  %v750 = vsel %vm747, %v749, %v745
  %v751 = vmul.f32 1.0, %v750
  %v752 = vtanh.pop %v731
  %754 = vrot.lane.b32.xlu0 %v698, 32
  %v755 = vpop.permute.xlu0 %754
  %v757 = vmul.f32 %v751, %v755
  %759 = vrot.lane.b32.xlu0 %v752, 64
  %v760 = vpop.permute.xlu0 %759
  %v762 = vmul.f32 %v751, %v760
  %764 = vrot.lane.b32.xlu0 %v762, 32
  %v765 = vpop.permute.xlu0 %764
  %v767 = vadd.f32 %v757, %v765
  %v768 = vtanh.pop %v767
  %770 = vrot.lane.b32.xlu0 %v768, 64
  %v771 = vpop.permute.xlu0 %770
  %v773 = vmul.f32 %v751, %v771
  %774 = vrot.lane.b32.xlu0 %v293, 32
  %v775 = vpop.permute.xlu0 %774
  %778 = vrot.lane.b32.xlu0 %v773, 64
  %v779 = vpop.permute.xlu0 %778
  %v781 = vsel %vm159, %v775, %v779
  %v783 = vsel %vm164, %v781, 0
  %785 = vmatpush.msra.mxu0 0.0
  %786 = vmatpush.msra.mxu0 0.0
  %787 = vmatpush.msra.mxu0 0.0
  %788 = vmatpush.msra.mxu0 0.0
  %789 = vmatpush.msra.mxu0 0.0
  %790 = vmatpush.msra.mxu0 0.0
  %791 = vmatpush.msra.mxu0 0.0
  %792 = vmatpush.msra.mxu0 0.0
  %793 = vmatpush.msra.mxu0 %v692
  %794 = vmatpush.msra.mxu0 %v691
  %795 = vmatpush.msra.mxu0 %v690
  %796 = vmatpush.msra.mxu0 %v689
  %797 = vmatpush.msra.mxu0 %v688
  %798 = vmatpush.msra.mxu0 %v687
  %799 = vmatpush.msra.mxu0 %v686
  %800 = vmatpush.msra.mxu0 %v685
  %801 = vmatmul.f32.gmra.mxu0 %v783
  %v802 = vpop.f32.mrf.mxu0
  %v803 = vadd.f32 %v708, %v802
  %804 = vdwg.mxu0
  %v805 = vxor.u32 %v803, 2147483648
  %v806 = vmul.f32 %v805, 1.442695
  %v807 = vpow.pop %v806
  %v808 = vadd.f32 %v807, 1.0
  %v809 = vrcp.pop %v808
  %v810 = vmul.f32 %v808, %v809
  %v811 = vsub.f32 1.0, %v810
  %v812 = vmul.f32 %v809, %v811
  %v813 = vadd.f32 %v809, %v812
  %vm814 = vweird.f32 %v808
  %vm815 = vweird.f32 %v809
  %vm816 = vmor %vm814, %vm815
  %v817 = vsel %vm816, %v809, %v813
  %v818 = vand.u32 2147483647, %v808
  %vm819 = vcmp.eq.f32.partialorder %v818, 8.507059e+37
  %v820 = vand.u32 %v808, 2147483648
  %v821 = vor.u32 1.1754944e-38, %v820
  %v822 = vsel %vm819, %v821, %v817
  %v823 = vmul.f32 1.0, %v822
  %v824 = vtanh.pop %v803
  %v825 = vmul.f32 %v823, %v767
  %827 = vrot.lane.b32.xlu0 %v824, 64
  %v828 = vpop.permute.xlu0 %827
  %v830 = vmul.f32 %v823, %v828
  %832 = vrot.lane.b32.xlu0 %v830, 32
  %v833 = vpop.permute.xlu0 %832
  %v835 = vadd.f32 %v825, %v833
  %v836 = vtanh.pop %v835
  %838 = vrot.lane.b32.xlu0 %v836, 64
  %v839 = vpop.permute.xlu0 %838
  %v841 = vmul.f32 %v823, %v839
  %842 = vrot.lane.b32.xlu0 %v358, 32
  %v843 = vpop.permute.xlu0 %842
  %846 = vrot.lane.b32.xlu0 %v841, 64
  %v847 = vpop.permute.xlu0 %846
  %v849 = vsel %vm159, %v843, %v847
  %v851 = vsel %vm164, %v849, 0
  %853 = vmatpush.msra.mxu0 0.0
  %854 = vmatpush.msra.mxu0 0.0
  %855 = vmatpush.msra.mxu0 0.0
  %856 = vmatpush.msra.mxu0 0.0
  %857 = vmatpush.msra.mxu0 0.0
  %858 = vmatpush.msra.mxu0 0.0
  %859 = vmatpush.msra.mxu0 0.0
  %860 = vmatpush.msra.mxu0 0.0
  %861 = vmatpush.msra.mxu0 %v692
  %862 = vmatpush.msra.mxu0 %v691
  %863 = vmatpush.msra.mxu0 %v690
  %864 = vmatpush.msra.mxu0 %v689
  %865 = vmatpush.msra.mxu0 %v688
  %866 = vmatpush.msra.mxu0 %v687
  %867 = vmatpush.msra.mxu0 %v686
  %868 = vmatpush.msra.mxu0 %v685
  %869 = vmatmul.f32.gmra.mxu0 %v851
  %v870 = vpop.f32.mrf.mxu0
  %v871 = vadd.f32 %v708, %v870
  %872 = vdwg.mxu0
  %v873 = vxor.u32 %v871, 2147483648
  %v874 = vmul.f32 %v873, 1.442695
  %v875 = vpow.pop %v874
  %v876 = vadd.f32 %v875, 1.0
  %v877 = vrcp.pop %v876
  %v878 = vmul.f32 %v876, %v877
  %v879 = vsub.f32 1.0, %v878
  %v880 = vmul.f32 %v877, %v879
  %v881 = vadd.f32 %v877, %v880
  %vm882 = vweird.f32 %v876
  %vm883 = vweird.f32 %v877
  %vm884 = vmor %vm882, %vm883
  %v885 = vsel %vm884, %v877, %v881
  %v886 = vand.u32 2147483647, %v876
  %vm887 = vcmp.eq.f32.partialorder %v886, 8.507059e+37
  %v888 = vand.u32 %v876, 2147483648
  %v889 = vor.u32 1.1754944e-38, %v888
  %v890 = vsel %vm887, %v889, %v885
  %v891 = vmul.f32 1.0, %v890
  %v892 = vtanh.pop %v871
  %v893 = vmul.f32 %v891, %v835
  %895 = vrot.lane.b32.xlu0 %v892, 64
  %v896 = vpop.permute.xlu0 %895
  %v898 = vmul.f32 %v891, %v896
  %900 = vrot.lane.b32.xlu0 %v898, 32
  %v901 = vpop.permute.xlu0 %900
  %v903 = vadd.f32 %v893, %v901
  %v904 = vtanh.pop %v903
  %906 = vrot.lane.b32.xlu0 %v904, 64
  %v907 = vpop.permute.xlu0 %906
  %v909 = vmul.f32 %v891, %v907
  %910 = vrot.lane.b32.xlu0 %v423, 32
  %v911 = vpop.permute.xlu0 %910
  %914 = vrot.lane.b32.xlu0 %v909, 64
  %v915 = vpop.permute.xlu0 %914
  %v917 = vsel %vm159, %v911, %v915
  %v919 = vsel %vm164, %v917, 0
  %921 = vmatpush.msra.mxu0 0.0
  %922 = vmatpush.msra.mxu0 0.0
  %923 = vmatpush.msra.mxu0 0.0
  %924 = vmatpush.msra.mxu0 0.0
  %925 = vmatpush.msra.mxu0 0.0
  %926 = vmatpush.msra.mxu0 0.0
  %927 = vmatpush.msra.mxu0 0.0
  %928 = vmatpush.msra.mxu0 0.0
  %929 = vmatpush.msra.mxu0 %v692
  %930 = vmatpush.msra.mxu0 %v691
  %931 = vmatpush.msra.mxu0 %v690
  %932 = vmatpush.msra.mxu0 %v689
  %933 = vmatpush.msra.mxu0 %v688
  %934 = vmatpush.msra.mxu0 %v687
  %935 = vmatpush.msra.mxu0 %v686
  %936 = vmatpush.msra.mxu0 %v685
  %937 = vmatmul.f32.gmra.mxu0 %v919
  %v938 = vpop.f32.mrf.mxu0
  %v939 = vadd.f32 %v708, %v938
  %940 = vdwg.mxu0
  %v941 = vxor.u32 %v939, 2147483648
  %v942 = vmul.f32 %v941, 1.442695
  %v943 = vpow.pop %v942
  %v944 = vadd.f32 %v943, 1.0
  %v945 = vrcp.pop %v944
  %v946 = vmul.f32 %v944, %v945
  %v947 = vsub.f32 1.0, %v946
  %v948 = vmul.f32 %v945, %v947
  %v949 = vadd.f32 %v945, %v948
  %vm950 = vweird.f32 %v944
  %vm951 = vweird.f32 %v945
  %vm952 = vmor %vm950, %vm951
  %v953 = vsel %vm952, %v945, %v949
  %v954 = vand.u32 2147483647, %v944
  %vm955 = vcmp.eq.f32.partialorder %v954, 8.507059e+37
  %v956 = vand.u32 %v944, 2147483648
  %v957 = vor.u32 1.1754944e-38, %v956
  %v958 = vsel %vm955, %v957, %v953
  %v959 = vmul.f32 1.0, %v958
  %v960 = vtanh.pop %v939
  %v961 = vmul.f32 %v959, %v903
  %963 = vrot.lane.b32.xlu0 %v960, 64
  %v964 = vpop.permute.xlu0 %963
  %v966 = vmul.f32 %v959, %v964
  %968 = vrot.lane.b32.xlu0 %v966, 32
  %v969 = vpop.permute.xlu0 %968
  %v971 = vadd.f32 %v961, %v969
  %v972 = vtanh.pop %v971
  %974 = vrot.lane.b32.xlu0 %v972, 64
  %v975 = vpop.permute.xlu0 %974
  %v977 = vmul.f32 %v959, %v975
  %978 = vrot.lane.b32.xlu0 %v488, 32
  %v979 = vpop.permute.xlu0 %978
  %982 = vrot.lane.b32.xlu0 %v977, 64
  %v983 = vpop.permute.xlu0 %982
  %v985 = vsel %vm159, %v979, %v983
  %v987 = vsel %vm164, %v985, 0
  %989 = vmatpush.msra.mxu0 0.0
  %990 = vmatpush.msra.mxu0 0.0
  %991 = vmatpush.msra.mxu0 0.0
  %992 = vmatpush.msra.mxu0 0.0
  %993 = vmatpush.msra.mxu0 0.0
  %994 = vmatpush.msra.mxu0 0.0
  %995 = vmatpush.msra.mxu0 0.0
  %996 = vmatpush.msra.mxu0 0.0
  %997 = vmatpush.msra.mxu0 %v692
  %998 = vmatpush.msra.mxu0 %v691
  %999 = vmatpush.msra.mxu0 %v690
  %1000 = vmatpush.msra.mxu0 %v689
  %1001 = vmatpush.msra.mxu0 %v688
  %1002 = vmatpush.msra.mxu0 %v687
  %1003 = vmatpush.msra.mxu0 %v686
  %1004 = vmatpush.msra.mxu0 %v685
  %1005 = vmatmul.f32.gmra.mxu0 %v987
  %v1006 = vpop.f32.mrf.mxu0
  %v1007 = vadd.f32 %v708, %v1006
  %1008 = vdwg.mxu0
  %v1009 = vxor.u32 %v1007, 2147483648
  %v1010 = vmul.f32 %v1009, 1.442695
  %v1011 = vpow.pop %v1010
  %v1012 = vadd.f32 %v1011, 1.0
  %v1013 = vrcp.pop %v1012
  %v1014 = vmul.f32 %v1012, %v1013
  %v1015 = vsub.f32 1.0, %v1014
  %v1016 = vmul.f32 %v1013, %v1015
  %v1017 = vadd.f32 %v1013, %v1016
  %vm1018 = vweird.f32 %v1012
  %vm1019 = vweird.f32 %v1013
  %vm1020 = vmor %vm1018, %vm1019
  %v1021 = vsel %vm1020, %v1013, %v1017
  %v1022 = vand.u32 2147483647, %v1012
  %vm1023 = vcmp.eq.f32.partialorder %v1022, 8.507059e+37
  %v1024 = vand.u32 %v1012, 2147483648
  %v1025 = vor.u32 1.1754944e-38, %v1024
  %v1026 = vsel %vm1023, %v1025, %v1021
  %v1027 = vmul.f32 1.0, %v1026
  %v1028 = vtanh.pop %v1007
  %v1029 = vmul.f32 %v1027, %v971
  %1031 = vrot.lane.b32.xlu0 %v1028, 64
  %v1032 = vpop.permute.xlu0 %1031
  %v1034 = vmul.f32 %v1027, %v1032
  %1036 = vrot.lane.b32.xlu0 %v1034, 32
  %v1037 = vpop.permute.xlu0 %1036
  %v1039 = vadd.f32 %v1029, %v1037
  %v1040 = vtanh.pop %v1039
  %1042 = vrot.lane.b32.xlu0 %v1040, 64
  %v1043 = vpop.permute.xlu0 %1042
  %v1045 = vmul.f32 %v1027, %v1043
  %1046 = vrot.lane.b32.xlu0 %v553, 32
  %v1047 = vpop.permute.xlu0 %1046
  %1050 = vrot.lane.b32.xlu0 %v1045, 64
  %v1051 = vpop.permute.xlu0 %1050
  %v1053 = vsel %vm159, %v1047, %v1051
  %v1055 = vsel %vm164, %v1053, 0
  %1057 = vmatpush.msra.mxu0 0.0
  %1058 = vmatpush.msra.mxu0 0.0
  %1059 = vmatpush.msra.mxu0 0.0
  %1060 = vmatpush.msra.mxu0 0.0
  %1061 = vmatpush.msra.mxu0 0.0
  %1062 = vmatpush.msra.mxu0 0.0
  %1063 = vmatpush.msra.mxu0 0.0
  %1064 = vmatpush.msra.mxu0 0.0
  %1065 = vmatpush.msra.mxu0 %v692
  %1066 = vmatpush.msra.mxu0 %v691
  %1067 = vmatpush.msra.mxu0 %v690
  %1068 = vmatpush.msra.mxu0 %v689
  %1069 = vmatpush.msra.mxu0 %v688
  %1070 = vmatpush.msra.mxu0 %v687
  %1071 = vmatpush.msra.mxu0 %v686
  %1072 = vmatpush.msra.mxu0 %v685
  %1073 = vmatmul.f32.gmra.mxu0 %v1055
  %v1074 = vpop.f32.mrf.mxu0
  %v1075 = vadd.f32 %v708, %v1074
  %1076 = vdwg.mxu0
  %v1077 = vxor.u32 %v1075, 2147483648
  %v1078 = vmul.f32 %v1077, 1.442695
  %v1079 = vpow.pop %v1078
  %v1080 = vadd.f32 %v1079, 1.0
  %v1081 = vrcp.pop %v1080
  %v1082 = vmul.f32 %v1080, %v1081
  %v1083 = vsub.f32 1.0, %v1082
  %v1084 = vmul.f32 %v1081, %v1083
  %v1085 = vadd.f32 %v1081, %v1084
  %vm1086 = vweird.f32 %v1080
  %vm1087 = vweird.f32 %v1081
  %vm1088 = vmor %vm1086, %vm1087
  %v1089 = vsel %vm1088, %v1081, %v1085
  %v1090 = vand.u32 2147483647, %v1080
  %vm1091 = vcmp.eq.f32.partialorder %v1090, 8.507059e+37
  %v1092 = vand.u32 %v1080, 2147483648
  %v1093 = vor.u32 1.1754944e-38, %v1092
  %v1094 = vsel %vm1091, %v1093, %v1089
  %v1095 = vmul.f32 1.0, %v1094
  %v1096 = vtanh.pop %v1075
  %v1097 = vmul.f32 %v1095, %v1039
  %1099 = vrot.lane.b32.xlu0 %v1096, 64
  %v1100 = vpop.permute.xlu0 %1099
  %v1102 = vmul.f32 %v1095, %v1100
  %1104 = vrot.lane.b32.xlu0 %v1102, 32
  %v1105 = vpop.permute.xlu0 %1104
  %v1107 = vadd.f32 %v1097, %v1105
  %v1108 = vtanh.pop %v1107
  %1110 = vrot.lane.b32.xlu0 %v1108, 64
  %v1111 = vpop.permute.xlu0 %1110
  %v1113 = vmul.f32 %v1095, %v1111
  %1114 = vrot.lane.b32.xlu0 %v618, 32
  %v1115 = vpop.permute.xlu0 %1114
  %1118 = vrot.lane.b32.xlu0 %v1113, 64
  %v1119 = vpop.permute.xlu0 %1118
  %v1121 = vsel %vm159, %v1115, %v1119
  %v1123 = vsel %vm164, %v1121, 0
  %1125 = vmatpush.msra.mxu0 0.0
  %1126 = vmatpush.msra.mxu0 0.0
  %1127 = vmatpush.msra.mxu0 0.0
  %1128 = vmatpush.msra.mxu0 0.0
  %1129 = vmatpush.msra.mxu0 0.0
  %1130 = vmatpush.msra.mxu0 0.0
  %1131 = vmatpush.msra.mxu0 0.0
  %1132 = vmatpush.msra.mxu0 0.0
  %1133 = vmatpush.msra.mxu0 %v692
  %1134 = vmatpush.msra.mxu0 %v691
  %1135 = vmatpush.msra.mxu0 %v690
  %1136 = vmatpush.msra.mxu0 %v689
  %1137 = vmatpush.msra.mxu0 %v688
  %1138 = vmatpush.msra.mxu0 %v687
  %1139 = vmatpush.msra.mxu0 %v686
  %1140 = vmatpush.msra.mxu0 %v685
  %1141 = vmatmul.f32.gmra.mxu0 %v1123
  %v1142 = vpop.f32.mrf.mxu0
  %v1143 = vadd.f32 %v708, %v1142
  %1144 = vdwg.mxu0
  %v1145 = vxor.u32 %v1143, 2147483648
  %v1146 = vmul.f32 %v1145, 1.442695
  %v1147 = vpow.pop %v1146
  %v1148 = vadd.f32 %v1147, 1.0
  %v1149 = vrcp.pop %v1148
  %v1150 = vmul.f32 %v1148, %v1149
  %v1151 = vsub.f32 1.0, %v1150
  %v1152 = vmul.f32 %v1149, %v1151
  %v1153 = vadd.f32 %v1149, %v1152
  %vm1154 = vweird.f32 %v1148
  %vm1155 = vweird.f32 %v1149
  %vm1156 = vmor %vm1154, %vm1155
  %v1157 = vsel %vm1156, %v1149, %v1153
  %v1158 = vand.u32 2147483647, %v1148
  %vm1159 = vcmp.eq.f32.partialorder %v1158, 8.507059e+37
  %v1160 = vand.u32 %v1148, 2147483648
  %v1161 = vor.u32 1.1754944e-38, %v1160
  %v1162 = vsel %vm1159, %v1161, %v1157
  %v1163 = vmul.f32 1.0, %v1162
  %v1164 = vtanh.pop %v1143
  %v1165 = vmul.f32 %v1163, %v1107
  %1167 = vrot.lane.b32.xlu0 %v1164, 64
  %v1168 = vpop.permute.xlu0 %1167
  %v1170 = vmul.f32 %v1163, %v1168
  %1172 = vrot.lane.b32.xlu0 %v1170, 32
  %v1173 = vpop.permute.xlu0 %1172
  %v1175 = vadd.f32 %v1165, %v1173
  %v1176 = vtanh.pop %v1175
  %1178 = vrot.lane.b32.xlu0 %v1176, 64
  %v1179 = vpop.permute.xlu0 %1178
  %v1181 = vmul.f32 %v1163, %v1179
  %1183 = vrot.lane.b32.xlu0 %v683, 32
  %v1184 = vpop.permute.xlu0 %1183
  %1187 = vrot.lane.b32.xlu0 %v1181, 64
  %v1188 = vpop.permute.xlu0 %1187
  %v1190 = vsel %vm159, %v1184, %v1188
  %v1192 = vsel %vm164, %v1190, 0
  %1194 = vmatpush.msra.mxu0 0.0
  %1195 = vmatpush.msra.mxu0 0.0
  %1196 = vmatpush.msra.mxu0 0.0
  %1197 = vmatpush.msra.mxu0 0.0
  %1198 = vmatpush.msra.mxu0 0.0
  %1199 = vmatpush.msra.mxu0 0.0
  %1200 = vmatpush.msra.mxu0 0.0
  %1201 = vmatpush.msra.mxu0 0.0
  %1202 = vmatpush.msra.mxu0 %v692
  %1203 = vmatpush.msra.mxu0 %v691
  %1204 = vmatpush.msra.mxu0 %v690
  %1205 = vmatpush.msra.mxu0 %v689
  %1206 = vmatpush.msra.mxu0 %v688
  %1207 = vmatpush.msra.mxu0 %v687
  %1208 = vmatpush.msra.mxu0 %v686
  %1209 = vmatpush.msra.mxu0 %v685
  %1210 = vmatmul.f32.gmra.mxu0 %v1192
  %v1211 = vpop.f32.mrf.mxu0
  %v1212 = vadd.f32 %v708, %v1211
  %1213 = vdwg.mxu0
  %v1214 = vxor.u32 %v1212, 2147483648
  %v1215 = vmul.f32 %v1214, 1.442695
  %v1216 = vpow.pop %v1215
  %v1217 = vadd.f32 %v1216, 1.0
  %v1218 = vrcp.pop %v1217
  %v1219 = vmul.f32 %v1217, %v1218
  %v1220 = vsub.f32 1.0, %v1219
  %v1221 = vmul.f32 %v1218, %v1220
  %v1222 = vadd.f32 %v1218, %v1221
  %vm1223 = vweird.f32 %v1217
  %vm1224 = vweird.f32 %v1218
  %vm1225 = vmor %vm1223, %vm1224
  %v1226 = vsel %vm1225, %v1218, %v1222
  %v1227 = vand.u32 2147483647, %v1217
  %vm1228 = vcmp.eq.f32.partialorder %v1227, 8.507059e+37
  %v1229 = vand.u32 %v1217, 2147483648
  %v1230 = vor.u32 1.1754944e-38, %v1229
  %v1231 = vsel %vm1228, %v1230, %v1226
  %v1232 = vmul.f32 1.0, %v1231
  %v1233 = vtanh.pop %v1212
  %v1234 = vmul.f32 %v1232, %v1175
  %1236 = vrot.lane.b32.xlu0 %v1233, 64
  %v1237 = vpop.permute.xlu0 %1236
  %v1239 = vmul.f32 %v1232, %v1237
  %1241 = vrot.lane.b32.xlu0 %v1239, 32
  %v1242 = vpop.permute.xlu0 %1241
  %v1244 = vadd.f32 %v1234, %v1242
  %v1245 = vtanh.pop %v1244
  %1247 = vrot.lane.b32.xlu0 %v1245, 64
  %v1248 = vpop.permute.xlu0 %1247
  %v1250 = vmul.f32 %v1232, %v1248
  %v1251 = vld [vmem:[%s6] sm:$0xff]
  %v1252 = vld [vmem:[%s6 + $0x8] sm:$0xff]
  %v1253 = vld [vmem:[%s6 + $0x10] sm:$0xff]
  %v1254 = vld [vmem:[%s6 + $0x18] sm:$0xff]
  %v1255 = vld [vmem:[%s7] sm:$0x1]
  %v1257 = vperm.slane %v1255, 0
  %1260 = vrot.lane.b32.xlu0 %v773, 32
  %v1261 = vpop.permute.xlu0 %1260
  %1262 = vrot.lane.b32.xlu0 %v841, 32
  %v1263 = vpop.permute.xlu0 %1262
  %1264 = vrot.lane.b32.xlu0 %v909, 32
  %v1265 = vpop.permute.xlu0 %1264
  %1266 = vrot.lane.b32.xlu0 %v977, 32
  %v1267 = vpop.permute.xlu0 %1266
  %1268 = vrot.lane.b32.xlu0 %v1045, 32
  %v1269 = vpop.permute.xlu0 %1268
  %1270 = vrot.lane.b32.xlu0 %v1113, 32
  %v1271 = vpop.permute.xlu0 %1270
  %1272 = vrot.lane.b32.xlu0 %v1181, 32
  %v1273 = vpop.permute.xlu0 %1272
  %1274 = vrot.lane.b32.xlu0 %v1250, 32
  %v1275 = vpop.permute.xlu0 %1274
  %v1276 = vsel %vm159, %v1261, 0
  %v1278 = vsel %vm159, %v1263, 0
  %v1280 = vsel %vm159, %v1265, 0
  %v1282 = vsel %vm159, %v1267, 0
  %v1284 = vsel %vm159, %v1269, 0
  %v1286 = vsel %vm159, %v1271, 0
  %v1288 = vsel %vm159, %v1273, 0
  %v1290 = vsel %vm159, %v1275, 0
  %1292 = vmatpush.msra.mxu0 0.0
  %1293 = vmatpush.msra.mxu0 0.0
  %1294 = vmatpush.msra.mxu0 0.0
  %1295 = vmatpush.msra.mxu0 0.0
  %1296 = vmatpush.msra.mxu0 0.0
  %1297 = vmatpush.msra.mxu0 0.0
  %1298 = vmatpush.msra.mxu0 0.0
  %1299 = vmatpush.msra.mxu0 0.0
  %1300 = vmatpush.msra.mxu0 0.0
  %1301 = vmatpush.msra.mxu0 0.0
  %1302 = vmatpush.msra.mxu0 0.0
  %1303 = vmatpush.msra.mxu0 0.0
  %1304 = vmatpush.msra.mxu0 %v1254
  %1305 = vmatpush.msra.mxu0 %v1253
  %1306 = vmatpush.msra.mxu0 %v1252
  %1307 = vmatpush.msra.mxu0 %v1251
  %1308 = vmatmul.f32.gmra.mxu0 %v1276
  %v1309 = vpop.f32.mrf.mxu0
  %v1310 = vadd.f32 %v1257, %v1309
  %1311 = vmatmul.f32.gmra.mxu0 %v1278
  %v1312 = vpop.f32.mrf.mxu0
  %v1313 = vadd.f32 %v1257, %v1312
  %1314 = vmatmul.f32.gmra.mxu0 %v1280
  %v1315 = vpop.f32.mrf.mxu0
  %v1316 = vadd.f32 %v1257, %v1315
  %1317 = vmatmul.f32.gmra.mxu0 %v1282
  %v1318 = vpop.f32.mrf.mxu0
  %v1319 = vadd.f32 %v1257, %v1318
  %1320 = vmatmul.f32.gmra.mxu0 %v1284
  %v1321 = vpop.f32.mrf.mxu0
  %v1322 = vadd.f32 %v1257, %v1321
  %1323 = vmatmul.f32.gmra.mxu0 %v1286
  %v1324 = vpop.f32.mrf.mxu0
  %v1325 = vadd.f32 %v1257, %v1324
  %1326 = vmatmul.f32.gmra.mxu0 %v1288
  %v1327 = vpop.f32.mrf.mxu0
  %v1328 = vadd.f32 %v1257, %v1327
  %1329 = vmatmul.f32.gmra.mxu0 %v1290
  %v1330 = vpop.f32.mrf.mxu0
  %v1331 = vadd.f32 %v1257, %v1330
  %1332 = vdwg.mxu0
  %1333 = vst [vmem:[%s8] sm:$0xff] %v1310
  %1334 = vst [vmem:[%s8 + $0x8] sm:$0xff] %v1313
  %1335 = vst [vmem:[%s8 + $0x10] sm:$0xff] %v1316
  %1336 = vst [vmem:[%s8 + $0x18] sm:$0xff] %v1319
  %1337 = vst [vmem:[%s8 + $0x20] sm:$0xff] %v1322
  %1338 = vst [vmem:[%s8 + $0x28] sm:$0xff] %v1325
  %1339 = vst [vmem:[%s8 + $0x30] sm:$0xff] %v1328
  %1340 = vst [vmem:[%s8 + $0x38] sm:$0xff] %v1331
  // Predicated region
  $region34: #{language_model_forward.1} parent=0 // pred_check
    _
  $region35: #{language_model_forward.1} parent=0 // pred_check_branch
    %1342 = sbr.rel (0) target = $region37
  $region36: #{language_model_forward.1} parent=0 // pred_region
    _
  $region37: #{language_model_forward.1} parent=0 // pred_fallthru
    _
  // Predicated region
  $region38: #{language_model_forward.1} parent=0 // pred_check
    _
  $region39: #{language_model_forward.1} parent=0 // pred_check_branch
    %1344 = sbr.rel (0) target = $region41
  $region40: #{language_model_forward.1} parent=0 // pred_region
    _
  $region41: #{language_model_forward.1} parent=0 // pred_fallthru
    _

</llo_original>
